<compile_context>
chip_gen: v6e
topology: v6e:2x2x1
jax: 0.10.0
libtpu: 0.0.40
codegen_flags: <defaults>
</compile_context>

<pallas_src>
import functools

import jax
import jax.numpy as jnp
from jax.experimental import pallas as pl
from jax.experimental.pallas import tpu as pltpu

_VMEM_LIMIT = 32 * 1024 * 1024          # safe scoped-VMEM budget on v5e/v6e/v7x
_RESIDENT_BYTES_CAP = 8 * 1024 * 1024   # max bytes for a VMEM-resident adj-rhs


def _round_up(x, m):
    return ((x + m - 1) // m) * m


def _pick_tiles(n_p):
    """Row tile (tile_m) and adj-column tile (tile_k) for a padded node dim."""
    tile_m = 128
    for cand in (512, 256):
        if n_p % cand == 0 and n_p // cand >= 2:   # keep >=2 row tiles (megacore)
            tile_m = cand
            break
    tile_k = 128
    for cand in (1024, 512, 256):
        if n_p % cand == 0:
            tile_k = cand
            break
    return tile_m, tile_k


# --------------------------------------------------------------------------
# Kernel A: per-row-tile feature transform (bf16 in, f32 acc).
# --------------------------------------------------------------------------
def _transform_kernel(h_ref, ws_ref, wn_ref, b_ref, hs_ref, hw_ref):
    h = h_ref[...]                                               # bf16 [tm, F_in_p]
    hs = jnp.dot(h, ws_ref[...], preferred_element_type=jnp.float32)
    hs_ref[...] = (hs + b_ref[...]).astype(hs_ref.dtype)         # f32 seed
    hw = jnp.dot(h, wn_ref[...], preferred_element_type=jnp.float32)
    hw_ref[...] = hw.astype(hw_ref.dtype)                        # bf16 rhs


def _transform_self_kernel(h_ref, ws_ref, b_ref, hs_ref):
    hs = jnp.dot(h_ref[...], ws_ref[...], preferred_element_type=jnp.float32)
    hs_ref[...] = (hs + b_ref[...]).astype(hs_ref.dtype)


# --------------------------------------------------------------------------
# Kernel B ("hw path"): out = relu(hs + adj @ hw); rhs width = f_out_p.
# --------------------------------------------------------------------------
def _agg_hw_kernel(hs_ref, adj_ref, hw_ref, o_ref, acc_ref, *, tile_k, resident):
    k = pl.program_id(1)

    @pl.when(k == 0)
    def _():
        acc_ref[...] = hs_ref[...]

    if resident:
        start = pl.multiple_of(k * tile_k, tile_k)
        hw = hw_ref[pl.ds(start, tile_k), :]
    else:
        hw = hw_ref[...]
    acc_ref[...] += jnp.dot(adj_ref[...], hw, preferred_element_type=jnp.float32)

    @pl.when(k == pl.num_programs(1) - 1)
    def _():
        o_ref[...] = jnp.maximum(acc_ref[...], 0.0).astype(o_ref.dtype)


# --------------------------------------------------------------------------
# Kernel B ("post path"): out = relu(hs + (adj @ h) @ W_neigh); rhs width = f_in_p.
# --------------------------------------------------------------------------
def _agg_post_kernel(hs_ref, adj_ref, h_ref, wn_ref, o_ref, acc_ref, *,
                     tile_k, resident):
    k = pl.program_id(1)

    @pl.when(k == 0)
    def _():
        acc_ref[...] = jnp.zeros_like(acc_ref)

    if resident:
        start = pl.multiple_of(k * tile_k, tile_k)
        hk = h_ref[pl.ds(start, tile_k), :]
    else:
        hk = h_ref[...]
    acc_ref[...] += jnp.dot(adj_ref[...], hk, preferred_element_type=jnp.float32)

    @pl.when(k == pl.num_programs(1) - 1)
    def _():
        t = acc_ref[...].astype(wn_ref.dtype)                    # bf16 for the MXU
        o = hs_ref[...] + jnp.dot(t, wn_ref[...],
                                  preferred_element_type=jnp.float32)
        o_ref[...] = jnp.maximum(o, 0.0).astype(o_ref.dtype)


# --------------------------------------------------------------------------
# One GraphSAGEConv layer on padded operands.
#   h_p:   [N_p, F_in_p]  bf16 (zero padded)
#   adj_p: [N_p, N_p]     bf16 (zero padded)
#   w_self_p / w_neigh_p: [F_in_p, F_out_p] bf16 (zero padded, pre-transposed)
#   b_p:   [1, F_out_p]   f32
# returns [N_p, F_out_p] out_dtype (padded rows contain relu(b): harmless,
# since padded adj columns are exactly zero and padded rows are sliced off).
# --------------------------------------------------------------------------
def sage_conv_padded(h_p, adj_p, w_self_p, w_neigh_p, b_p, *,
                     tile_m, tile_k, out_dtype):
    n_p, f_in_p = h_p.shape
    f_out_p = w_self_p.shape[1]
    n_row = n_p // tile_m
    n_k = n_p // tile_k

    cparams_1d = pltpu.CompilerParams(
        dimension_semantics=("parallel",), vmem_limit_bytes=_VMEM_LIMIT)
    cparams_2d = pltpu.CompilerParams(
        dimension_semantics=("parallel", "arbitrary"),
        vmem_limit_bytes=_VMEM_LIMIT)

    # rhs of the O(N^2) matmul = the narrower padded side.
    use_post = f_in_p < f_out_p
    rhs_width = f_in_p if use_post else f_out_p
    resident = (n_p * rhs_width * 2) <= _RESIDENT_BYTES_CAP

    # ---- Kernel A: transform ------------------------------------------------
    if use_post:
        hs_p = pl.pallas_call(
            _transform_self_kernel,
            out_shape=jax.ShapeDtypeStruct((n_p, f_out_p), jnp.float32),
            grid=(n_row,),
            in_specs=[
                pl.BlockSpec((tile_m, f_in_p), lambda i: (i, 0)),
                pl.BlockSpec((f_in_p, f_out_p), lambda i: (0, 0)),
                pl.BlockSpec((1, f_out_p), lambda i: (0, 0)),
            ],
            out_specs=pl.BlockSpec((tile_m, f_out_p), lambda i: (i, 0)),
            compiler_params=cparams_1d,
        )(h_p, w_self_p, b_p)
        rhs_p = h_p                                   # bf16, width f_in_p
    else:
        hs_p, rhs_p = pl.pallas_call(
            _transform_kernel,
            out_shape=(jax.ShapeDtypeStruct((n_p, f_out_p), jnp.float32),
                       jax.ShapeDtypeStruct((n_p, f_out_p), jnp.bfloat16)),
            grid=(n_row,),
            in_specs=[
                pl.BlockSpec((tile_m, f_in_p), lambda i: (i, 0)),
                pl.BlockSpec((f_in_p, f_out_p), lambda i: (0, 0)),
                pl.BlockSpec((f_in_p, f_out_p), lambda i: (0, 0)),
                pl.BlockSpec((1, f_out_p), lambda i: (0, 0)),
            ],
            out_specs=(pl.BlockSpec((tile_m, f_out_p), lambda i: (i, 0)),
                       pl.BlockSpec((tile_m, f_out_p), lambda i: (i, 0))),
            compiler_params=cparams_1d,
        )(h_p, w_self_p, w_neigh_p, b_p)

    # ---- Kernel B: aggregate ------------------------------------------------
    if resident:
        rhs_spec = pl.BlockSpec((n_p, rhs_width), lambda i, k: (0, 0))
    else:
        rhs_spec = pl.BlockSpec((tile_k, rhs_width), lambda i, k: (k, 0))

    out_bytes = jnp.dtype(out_dtype).itemsize
    cost = pl.CostEstimate(
        flops=2 * n_p * n_p * rhs_width
              + (2 * n_p * f_in_p * f_out_p if use_post else 0),
        transcendentals=0,
        bytes_accessed=int(
            n_p * n_p * 2                                           # adj (bf16)
            + (n_p if resident else n_row * n_p) * rhs_width * 2    # rhs (bf16)
            + n_p * f_out_p * 4                                     # hs (f32)
            + n_p * f_out_p * out_bytes))                           # out

    common = dict(
        out_shape=jax.ShapeDtypeStruct((n_p, f_out_p), out_dtype),
        grid=(n_row, n_k),
        out_specs=pl.BlockSpec((tile_m, f_out_p), lambda i, k: (i, 0)),
        compiler_params=cparams_2d,
        cost_estimate=cost,
    )

    if use_post:
        out_p = pl.pallas_call(
            functools.partial(_agg_post_kernel, tile_k=tile_k, resident=resident),
            in_specs=[
                pl.BlockSpec((tile_m, f_out_p), lambda i, k: (i, 0)),   # hs
                pl.BlockSpec((tile_m, tile_k), lambda i, k: (i, k)),    # adj
                rhs_spec,                                               # h (bf16)
                pl.BlockSpec((f_in_p, f_out_p), lambda i, k: (0, 0)),   # W_neigh
            ],
            scratch_shapes=[pltpu.VMEM((tile_m, f_in_p), jnp.float32)],
            **common,
        )(hs_p, adj_p, rhs_p, w_neigh_p)
    else:
        out_p = pl.pallas_call(
            functools.partial(_agg_hw_kernel, tile_k=tile_k, resident=resident),
            in_specs=[
                pl.BlockSpec((tile_m, f_out_p), lambda i, k: (i, 0)),   # hs
                pl.BlockSpec((tile_m, tile_k), lambda i, k: (i, k)),    # adj
                rhs_spec,                                               # hw (bf16)
            ],
            scratch_shapes=[pltpu.VMEM((tile_m, f_out_p), jnp.float32)],
            **common,
        )(hs_p, adj_p, rhs_p)
    return out_p


# --------------------------------------------------------------------------
# One-time (outside-jit) preparation: padding, bf16 casts, weight split.
# --------------------------------------------------------------------------
def _prep_linear(weight, bias, f_in, f_in_p, f_out_p):
    """Split PyTorch [F_out, 2*F_in] weight into padded bf16 self/neigh halves."""
    f_out = weight.shape[0]
    w_t = weight.T                                   # [2*F_in, F_out]
    pad = ((0, f_in_p - f_in), (0, f_out_p - f_out))
    w_self = jnp.pad(w_t[:f_in], pad).astype(jnp.bfloat16)
    w_neigh = jnp.pad(w_t[f_in:], pad).astype(jnp.bfloat16)
    b = jnp.pad(bias, (0, f_out_p - f_out)).reshape(1, f_out_p).astype(jnp.float32)
    return w_self, w_neigh, b


def prepare_params(params, in_feats, hidden, out_feats):
    f_in_p = _round_up(in_feats, 128)
    hid_p = _round_up(hidden, 128)
    f_out_p = _round_up(out_feats, 128)
    w1s, w1n, b1 = _prep_linear(params["w1"], params["b1"], in_feats, f_in_p, hid_p)
    w2s, w2n, b2 = _prep_linear(params["w2"], params["b2"], hidden, hid_p, f_out_p)
    return {"w1s": w1s, "w1n": w1n, "b1": b1,
            "w2s": w2s, "w2n": w2n, "b2": b2}


def prepare_adj(adj, n_p):
    n = adj.shape[0]
    return jnp.pad(adj, ((0, n_p - n), (0, n_p - n))).astype(jnp.bfloat16)


def prepare_features(features, n_p, f_in_p):
    n, f = features.shape
    return jnp.pad(features, ((0, n_p - n), (0, f_in_p - f))).astype(jnp.bfloat16)


def graphsage_forward(h_p, adj_p, prepped):
    """Two-layer GraphSAGE forward on padded bf16 operands (jit this)."""
    n_p = adj_p.shape[0]
    tile_m, tile_k = _pick_tiles(n_p)
    h1 = sage_conv_padded(h_p, adj_p, prepped["w1s"], prepped["w1n"], prepped["b1"],
                          tile_m=tile_m, tile_k=tile_k, out_dtype=jnp.bfloat16)
    h2 = sage_conv_padded(h1, adj_p, prepped["w2s"], prepped["w2n"], prepped["b2"],
                          tile_m=tile_m, tile_k=tile_k, out_dtype=jnp.float32)
    return h2


def init_params(key, in_feats, hidden_size, out_feats):
    k1, k2, k3, k4 = jax.random.split(key, 4)
    scale1 = 1.0 / jnp.sqrt(2.0 * in_feats)
    scale2 = 1.0 / jnp.sqrt(2.0 * hidden_size)
    return {
        "w1": jax.random.uniform(k1, (hidden_size, 2 * in_feats),
                                 jnp.float32, -scale1, scale1),
        "b1": jax.random.uniform(k2, (hidden_size,),
                                 jnp.float32, -scale1, scale1),
        "w2": jax.random.uniform(k3, (out_feats, 2 * hidden_size),
                                 jnp.float32, -scale2, scale2),
        "b2": jax.random.uniform(k4, (out_feats,),
                                 jnp.float32, -scale2, scale2),
    }


if __name__ == "__main__":
    # Small graph: 16 nodes, 8 input features, hidden 200 (pads to 256 so the
    # "post" association path is exercised in layer 1 and the "hw" path in
    # layer 2), output 8.
    N, IN_FEATS, HIDDEN, OUT_FEATS = 16, 8, 200, 8

    key = jax.random.PRNGKey(0)
    k_feat, k_adj, k_param = jax.random.split(key, 3)

    features = jax.random.normal(k_feat, (N, IN_FEATS), jnp.float32)
    # random (dense) adjacency with self-loops, row-normalized
    adj_raw = (jax.random.uniform(k_adj, (N, N)) > 0.7).astype(jnp.float32)
    adj_raw = adj_raw + jnp.eye(N, dtype=jnp.float32)
    adj = adj_raw / jnp.sum(adj_raw, axis=1, keepdims=True)

    params = init_params(k_param, IN_FEATS, HIDDEN, OUT_FEATS)

    # One-time host-side prep (hoisted out of the jitted forward so repeated
    # inference does not re-pad / re-cast the O(N^2) adjacency).
    n_p = _round_up(N, 128)
    f_in_p = _round_up(IN_FEATS, 128)
    adj_p = prepare_adj(adj, n_p)
    h_p = prepare_features(features, n_p, f_in_p)
    prepped = prepare_params(params, IN_FEATS, HIDDEN, OUT_FEATS)

    fwd = jax.jit(graphsage_forward)
    out_p = jax.block_until_ready(fwd(h_p, adj_p, prepped))
    out = out_p[:N, :OUT_FEATS]

    # reference check in plain JAX (same math as the PyTorch module, f32)
    def ref_layer(h, a, w, b):
        combined = jnp.concatenate([h, a @ h], axis=1)
        return jax.nn.relu(combined @ w.T + b)

    ref = ref_layer(ref_layer(features, adj, params["w1"], params["b1"]),
                    adj, params["w2"], params["b2"])
    assert out.shape == (N, OUT_FEATS)
    # bf16 h / adj / weights / intermediates on the MXU -> loose tolerance
    err = float(jnp.max(jnp.abs(out - ref)))
    assert jnp.allclose(out, ref, atol=2e-2, rtol=2e-2), err

    print("KERNEL_OK")
</pallas_src>

<mosaic_0001>
module attributes {stable_mosaic.version = 11 : i64} {
  func.func @_transform_kernel(%arg0: i32, %arg1: memref<128x256xbf16, #tpu.memory_space<vmem>>, %arg2: memref<256x128xbf16, #tpu.memory_space<vmem>>, %arg3: memref<256x128xbf16, #tpu.memory_space<vmem>>, %arg4: memref<1x128xf32, #tpu.memory_space<vmem>>, %arg5: memref<128x128xf32, #tpu.memory_space<vmem>>, %arg6: memref<128x128xbf16, #tpu.memory_space<vmem>>) attributes {dimension_semantics = [#tpu.dimension_semantics<parallel>], iteration_bounds = array<i64: 1>, scalar_prefetch = 0 : i64, scratch_operands = 0 : i64, tpu.core_type = #tpu.core_type<tc>, window_params = [{transform_indices = @transform_0, window_bounds = array<i64: 128, 256>}, {pipeline_mode = #tpu.pipeline_mode<synchronous>, transform_indices = @transform_1, window_bounds = array<i64: 256, 128>}, {pipeline_mode = #tpu.pipeline_mode<synchronous>, transform_indices = @transform_2, window_bounds = array<i64: 256, 128>}, {pipeline_mode = #tpu.pipeline_mode<synchronous>, transform_indices = @transform_3, window_bounds = array<i64: 1, 128>}, {transform_indices = @transform_4, window_bounds = array<i64: 128, 128>}, {transform_indices = @transform_5, window_bounds = array<i64: 128, 128>}]} {
    %c0 = arith.constant 0 : index
    %c0_0 = arith.constant 0 : index
    %0 = vector.load %arg1[%c0, %c0_0] : memref<128x256xbf16, #tpu.memory_space<vmem>>, vector<128x256xbf16>
    %c0_1 = arith.constant 0 : index
    %c0_2 = arith.constant 0 : index
    %1 = vector.load %arg2[%c0_1, %c0_2] : memref<256x128xbf16, #tpu.memory_space<vmem>>, vector<256x128xbf16>
    %cst = arith.constant dense<0.000000e+00> : vector<128x128xf32>
    %2 = tpu.matmul %0, %1, %cst {dimension_numbers = #tpu.dot_dimension_numbers<[1], [0], [0], [1], [0, 0, 1, 1], [], []>} : vector<128x256xbf16>, vector<256x128xbf16>, vector<128x128xf32> -> vector<128x128xf32>
    %c0_3 = arith.constant 0 : index
    %c0_4 = arith.constant 0 : index
    %3 = vector.load %arg4[%c0_3, %c0_4] : memref<1x128xf32, #tpu.memory_space<vmem>>, vector<1x128xf32>
    %4 = vector.broadcast %3 : vector<1x128xf32> to vector<128x128xf32>
    %5 = arith.addf %2, %4 : vector<128x128xf32>
    %c0_5 = arith.constant 0 : index
    %c0_6 = arith.constant 0 : index
    %6 = vector.load %arg5[%c0_5, %c0_6] : memref<128x128xf32, #tpu.memory_space<vmem>>, vector<128x128xf32>
    tpu.vector_store %arg5[%c0_5, %c0_6], %5 {strides = array<i32>} : memref<128x128xf32, #tpu.memory_space<vmem>>, vector<128x128xf32>,
    %c0_7 = arith.constant 0 : index
    %c0_8 = arith.constant 0 : index
    %7 = vector.load %arg3[%c0_7, %c0_8] : memref<256x128xbf16, #tpu.memory_space<vmem>>, vector<256x128xbf16>
    %cst_9 = arith.constant dense<0.000000e+00> : vector<128x128xf32>
    %8 = tpu.matmul %0, %7, %cst_9 {dimension_numbers = #tpu.dot_dimension_numbers<[1], [0], [0], [1], [0, 0, 1, 1], [], []>} : vector<128x256xbf16>, vector<256x128xbf16>, vector<128x128xf32> -> vector<128x128xf32>
    %9 = arith.truncf %8 : vector<128x128xf32> to vector<128x128xbf16>
    %c0_10 = arith.constant 0 : index
    %c0_11 = arith.constant 0 : index
    %10 = vector.load %arg6[%c0_10, %c0_11] : memref<128x128xbf16, #tpu.memory_space<vmem>>, vector<128x128xbf16>
    tpu.vector_store %arg6[%c0_10, %c0_11], %9 {strides = array<i32>} : memref<128x128xbf16, #tpu.memory_space<vmem>>, vector<128x128xbf16>,
    return
  }
  func.func @transform_0(%arg0: i32) -> (i32, i32) {
    %c0_i32 = arith.constant 0 : i32
    %c0_i32_0 = arith.constant 0 : i32
    return %arg0, %c0_i32 : i32, i32
  }
  func.func @transform_1(%arg0: i32) -> (i32, i32) {
    %c0_i32 = arith.constant 0 : i32
    %c0_i32_0 = arith.constant 0 : i32
    %c0_i32_1 = arith.constant 0 : i32
    return %c0_i32, %c0_i32_0 : i32, i32
  }
  func.func @transform_2(%arg0: i32) -> (i32, i32) {
    %c0_i32 = arith.constant 0 : i32
    %c0_i32_0 = arith.constant 0 : i32
    %c0_i32_1 = arith.constant 0 : i32
    return %c0_i32, %c0_i32_0 : i32, i32
  }
  func.func @transform_3(%arg0: i32) -> (i32, i32) {
    %c0_i32 = arith.constant 0 : i32
    %c0_i32_0 = arith.constant 0 : i32
    %c0_i32_1 = arith.constant 0 : i32
    return %c0_i32, %c0_i32_0 : i32, i32
  }
  func.func @transform_4(%arg0: i32) -> (i32, i32) {
    %c0_i32 = arith.constant 0 : i32
    %c0_i32_0 = arith.constant 0 : i32
    return %arg0, %c0_i32 : i32, i32
  }
  func.func @transform_5(%arg0: i32) -> (i32, i32) {
    %c0_i32 = arith.constant 0 : i32
    %c0_i32_0 = arith.constant 0 : i32
    return %arg0, %c0_i32 : i32, i32
  }
}

module attributes {stable_mosaic.version = 11 : i64} {
  func.func @_transform_self_kernel(%arg0: i32, %arg1: memref<128x128xbf16, #tpu.memory_space<vmem>>, %arg2: memref<128x256xbf16, #tpu.memory_space<vmem>>, %arg3: memref<1x256xf32, #tpu.memory_space<vmem>>, %arg4: memref<128x256xf32, #tpu.memory_space<vmem>>) attributes {dimension_semantics = [#tpu.dimension_semantics<parallel>], iteration_bounds = array<i64: 1>, scalar_prefetch = 0 : i64, scratch_operands = 0 : i64, tpu.core_type = #tpu.core_type<tc>, window_params = [{transform_indices = @transform_0, window_bounds = array<i64: 128, 128>}, {pipeline_mode = #tpu.pipeline_mode<synchronous>, transform_indices = @transform_1, window_bounds = array<i64: 128, 256>}, {pipeline_mode = #tpu.pipeline_mode<synchronous>, transform_indices = @transform_2, window_bounds = array<i64: 1, 256>}, {transform_indices = @transform_3, window_bounds = array<i64: 128, 256>}]} {
    %c0 = arith.constant 0 : index
    %c0_0 = arith.constant 0 : index
    %0 = vector.load %arg1[%c0, %c0_0] : memref<128x128xbf16, #tpu.memory_space<vmem>>, vector<128x128xbf16>
    %c0_1 = arith.constant 0 : index
    %c0_2 = arith.constant 0 : index
    %1 = vector.load %arg2[%c0_1, %c0_2] : memref<128x256xbf16, #tpu.memory_space<vmem>>, vector<128x256xbf16>
    %cst = arith.constant dense<0.000000e+00> : vector<128x256xf32>
    %2 = tpu.matmul %0, %1, %cst {dimension_numbers = #tpu.dot_dimension_numbers<[1], [0], [0], [1], [0, 0, 1, 1], [], []>} : vector<128x128xbf16>, vector<128x256xbf16>, vector<128x256xf32> -> vector<128x256xf32>
    %c0_3 = arith.constant 0 : index
    %c0_4 = arith.constant 0 : index
    %3 = vector.load %arg3[%c0_3, %c0_4] : memref<1x256xf32, #tpu.memory_space<vmem>>, vector<1x256xf32>
    %4 = vector.broadcast %3 : vector<1x256xf32> to vector<128x256xf32>
    %5 = arith.addf %2, %4 : vector<128x256xf32>
    %c0_5 = arith.constant 0 : index
    %c0_6 = arith.constant 0 : index
    %6 = vector.load %arg4[%c0_5, %c0_6] : memref<128x256xf32, #tpu.memory_space<vmem>>, vector<128x256xf32>
    tpu.vector_store %arg4[%c0_5, %c0_6], %5 {strides = array<i32>} : memref<128x256xf32, #tpu.memory_space<vmem>>, vector<128x256xf32>,
    return
  }
  func.func @transform_0(%arg0: i32) -> (i32, i32) {
    %c0_i32 = arith.constant 0 : i32
    %c0_i32_0 = arith.constant 0 : i32
    return %arg0, %c0_i32 : i32, i32
  }
  func.func @transform_1(%arg0: i32) -> (i32, i32) {
    %c0_i32 = arith.constant 0 : i32
    %c0_i32_0 = arith.constant 0 : i32
    %c0_i32_1 = arith.constant 0 : i32
    return %c0_i32, %c0_i32_0 : i32, i32
  }
  func.func @transform_2(%arg0: i32) -> (i32, i32) {
    %c0_i32 = arith.constant 0 : i32
    %c0_i32_0 = arith.constant 0 : i32
    %c0_i32_1 = arith.constant 0 : i32
    return %c0_i32, %c0_i32_0 : i32, i32
  }
  func.func @transform_3(%arg0: i32) -> (i32, i32) {
    %c0_i32 = arith.constant 0 : i32
    %c0_i32_0 = arith.constant 0 : i32
    return %arg0, %c0_i32 : i32, i32
  }
}

module attributes {stable_mosaic.version = 11 : i64} {
  func.func @_agg_hw_kernel(%arg0: i32, %arg1: i32, %arg2: memref<128x128xf32, #tpu.memory_space<vmem>>, %arg3: memref<128x128xbf16, #tpu.memory_space<vmem>>, %arg4: memref<128x128xbf16, #tpu.memory_space<vmem>>, %arg5: memref<128x128xf32, #tpu.memory_space<vmem>>, %arg6: memref<128x128xf32, #tpu.memory_space<vmem>>) attributes {dimension_semantics = [#tpu.dimension_semantics<parallel>, #tpu.dimension_semantics<arbitrary>], iteration_bounds = array<i64: 1, 1>, scalar_prefetch = 0 : i64, scratch_operands = 1 : i64, tpu.core_type = #tpu.core_type<tc>, window_params = [{transform_indices = @transform_0, window_bounds = array<i64: 128, 128>}, {transform_indices = @transform_1, window_bounds = array<i64: 128, 128>}, {pipeline_mode = #tpu.pipeline_mode<synchronous>, transform_indices = @transform_2, window_bounds = array<i64: 128, 128>}, {transform_indices = @transform_3, window_bounds = array<i64: 128, 128>}]} {
    %c0_i32 = arith.constant 0 : i32
    %0 = arith.cmpi eq, %arg1, %c0_i32 : i32
    %1 = arith.extui %0 : i1 to i32
    %c0_i32_0 = arith.constant 0 : i32
    %2 = arith.cmpi ne, %1, %c0_i32_0 : i32
    scf.if %2 {
      %c0_9 = arith.constant 0 : index
      %c0_10 = arith.constant 0 : index
      %15 = vector.load %arg2[%c0_9, %c0_10] : memref<128x128xf32, #tpu.memory_space<vmem>>, vector<128x128xf32>
      %c0_11 = arith.constant 0 : index
      %c0_12 = arith.constant 0 : index
      %16 = vector.load %arg6[%c0_11, %c0_12] : memref<128x128xf32, #tpu.memory_space<vmem>>, vector<128x128xf32>
      tpu.vector_store %arg6[%c0_11, %c0_12], %15 {strides = array<i32>} : memref<128x128xf32, #tpu.memory_space<vmem>>, vector<128x128xf32>,
    } else {
    }
    %c128_i32 = arith.constant 128 : i32
    %3 = arith.muli %arg1, %c128_i32 : i32
    %4 = tpu.assume_multiple %3, 128 : i32
    %5 = arith.index_cast %4 : i32 to index
    %c0 = arith.constant 0 : index
    %6 = vector.load %arg4[%5, %c0] : memref<128x128xbf16, #tpu.memory_space<vmem>>, vector<128x128xbf16>
    %c0_1 = arith.constant 0 : index
    %c0_2 = arith.constant 0 : index
    %7 = vector.load %arg6[%c0_1, %c0_2] : memref<128x128xf32, #tpu.memory_space<vmem>>, vector<128x128xf32>
    %c0_3 = arith.constant 0 : index
    %c0_4 = arith.constant 0 : index
    %8 = vector.load %arg3[%c0_3, %c0_4] : memref<128x128xbf16, #tpu.memory_space<vmem>>, vector<128x128xbf16>
    %cst = arith.constant dense<0.000000e+00> : vector<128x128xf32>
    %9 = tpu.matmul %8, %6, %cst {dimension_numbers = #tpu.dot_dimension_numbers<[1], [0], [0], [1], [0, 0, 1, 1], [], []>} : vector<128x128xbf16>, vector<128x128xbf16>, vector<128x128xf32> -> vector<128x128xf32>
    %10 = arith.addf %7, %9 : vector<128x128xf32>
    %c0_5 = arith.constant 0 : index
    %c0_6 = arith.constant 0 : index
    %11 = vector.load %arg6[%c0_5, %c0_6] : memref<128x128xf32, #tpu.memory_space<vmem>>, vector<128x128xf32>
    tpu.vector_store %arg6[%c0_5, %c0_6], %10 {strides = array<i32>} : memref<128x128xf32, #tpu.memory_space<vmem>>, vector<128x128xf32>,
    %c0_i32_7 = arith.constant 0 : i32
    %12 = arith.cmpi eq, %arg1, %c0_i32_7 : i32
    %13 = arith.extui %12 : i1 to i32
    %c0_i32_8 = arith.constant 0 : i32
    %14 = arith.cmpi ne, %13, %c0_i32_8 : i32
    scf.if %14 {
      %c0_9 = arith.constant 0 : index
      %c0_10 = arith.constant 0 : index
      %15 = vector.load %arg6[%c0_9, %c0_10] : memref<128x128xf32, #tpu.memory_space<vmem>>, vector<128x128xf32>
      %cst_11 = arith.constant 0.000000e+00 : f32
      %16 = vector.broadcast %cst_11 : f32 to vector<128x128xf32>
      %17 = arith.maximumf %15, %16 : vector<128x128xf32>
      %c0_12 = arith.constant 0 : index
      %c0_13 = arith.constant 0 : index
      %18 = vector.load %arg5[%c0_12, %c0_13] : memref<128x128xf32, #tpu.memory_space<vmem>>, vector<128x128xf32>
      tpu.vector_store %arg5[%c0_12, %c0_13], %17 {strides = array<i32>} : memref<128x128xf32, #tpu.memory_space<vmem>>, vector<128x128xf32>,
    } else {
    }
    return
  }
  func.func @transform_0(%arg0: i32, %arg1: i32) -> (i32, i32) {
    %c0_i32 = arith.constant 0 : i32
    %c0_i32_0 = arith.constant 0 : i32
    return %arg0, %c0_i32 : i32, i32
  }
  func.func @transform_1(%arg0: i32, %arg1: i32) -> (i32, i32) {
    %c0_i32 = arith.constant 0 : i32
    return %arg0, %arg1 : i32, i32
  }
  func.func @transform_2(%arg0: i32, %arg1: i32) -> (i32, i32) {
    %c0_i32 = arith.constant 0 : i32
    %c0_i32_0 = arith.constant 0 : i32
    %c0_i32_1 = arith.constant 0 : i32
    return %c0_i32, %c0_i32_0 : i32, i32
  }
  func.func @transform_3(%arg0: i32, %arg1: i32) -> (i32, i32) {
    %c0_i32 = arith.constant 0 : i32
    %c0_i32_0 = arith.constant 0 : i32
    return %arg0, %c0_i32 : i32, i32
  }
}

module attributes {stable_mosaic.version = 11 : i64} {
  func.func @_agg_post_kernel(%arg0: i32, %arg1: i32, %arg2: memref<128x256xf32, #tpu.memory_space<vmem>>, %arg3: memref<128x128xbf16, #tpu.memory_space<vmem>>, %arg4: memref<128x128xbf16, #tpu.memory_space<vmem>>, %arg5: memref<128x256xbf16, #tpu.memory_space<vmem>>, %arg6: memref<128x256xbf16, #tpu.memory_space<vmem>>, %arg7: memref<128x128xf32, #tpu.memory_space<vmem>>) attributes {dimension_semantics = [#tpu.dimension_semantics<parallel>, #tpu.dimension_semantics<arbitrary>], iteration_bounds = array<i64: 1, 1>, scalar_prefetch = 0 : i64, scratch_operands = 1 : i64, tpu.core_type = #tpu.core_type<tc>, window_params = [{transform_indices = @transform_0, window_bounds = array<i64: 128, 256>}, {transform_indices = @transform_1, window_bounds = array<i64: 128, 128>}, {pipeline_mode = #tpu.pipeline_mode<synchronous>, transform_indices = @transform_2, window_bounds = array<i64: 128, 128>}, {pipeline_mode = #tpu.pipeline_mode<synchronous>, transform_indices = @transform_3, window_bounds = array<i64: 128, 256>}, {transform_indices = @transform_4, window_bounds = array<i64: 128, 256>}]} {
    %c0_i32 = arith.constant 0 : i32
    %0 = arith.cmpi eq, %arg1, %c0_i32 : i32
    %1 = arith.extui %0 : i1 to i32
    %c0_i32_0 = arith.constant 0 : i32
    %2 = arith.cmpi ne, %1, %c0_i32_0 : i32
    scf.if %2 {
      %cst_9 = arith.constant 0.000000e+00 : f32
      %15 = vector.broadcast %cst_9 : f32 to vector<128x128xf32>
      %c0_10 = arith.constant 0 : index
      %c0_11 = arith.constant 0 : index
      %16 = vector.load %arg7[%c0_10, %c0_11] : memref<128x128xf32, #tpu.memory_space<vmem>>, vector<128x128xf32>
      tpu.vector_store %arg7[%c0_10, %c0_11], %15 {strides = array<i32>} : memref<128x128xf32, #tpu.memory_space<vmem>>, vector<128x128xf32>,
    } else {
    }
    %c128_i32 = arith.constant 128 : i32
    %3 = arith.muli %arg1, %c128_i32 : i32
    %4 = tpu.assume_multiple %3, 128 : i32
    %5 = arith.index_cast %4 : i32 to index
    %c0 = arith.constant 0 : index
    %6 = vector.load %arg4[%5, %c0] : memref<128x128xbf16, #tpu.memory_space<vmem>>, vector<128x128xbf16>
    %c0_1 = arith.constant 0 : index
    %c0_2 = arith.constant 0 : index
    %7 = vector.load %arg7[%c0_1, %c0_2] : memref<128x128xf32, #tpu.memory_space<vmem>>, vector<128x128xf32>
    %c0_3 = arith.constant 0 : index
    %c0_4 = arith.constant 0 : index
    %8 = vector.load %arg3[%c0_3, %c0_4] : memref<128x128xbf16, #tpu.memory_space<vmem>>, vector<128x128xbf16>
    %cst = arith.constant dense<0.000000e+00> : vector<128x128xf32>
    %9 = tpu.matmul %8, %6, %cst {dimension_numbers = #tpu.dot_dimension_numbers<[1], [0], [0], [1], [0, 0, 1, 1], [], []>} : vector<128x128xbf16>, vector<128x128xbf16>, vector<128x128xf32> -> vector<128x128xf32>
    %10 = arith.addf %7, %9 : vector<128x128xf32>
    %c0_5 = arith.constant 0 : index
    %c0_6 = arith.constant 0 : index
    %11 = vector.load %arg7[%c0_5, %c0_6] : memref<128x128xf32, #tpu.memory_space<vmem>>, vector<128x128xf32>
    tpu.vector_store %arg7[%c0_5, %c0_6], %10 {strides = array<i32>} : memref<128x128xf32, #tpu.memory_space<vmem>>, vector<128x128xf32>,
    %c0_i32_7 = arith.constant 0 : i32
    %12 = arith.cmpi eq, %arg1, %c0_i32_7 : i32
    %13 = arith.extui %12 : i1 to i32
    %c0_i32_8 = arith.constant 0 : i32
    %14 = arith.cmpi ne, %13, %c0_i32_8 : i32
    scf.if %14 {
      %c0_9 = arith.constant 0 : index
      %c0_10 = arith.constant 0 : index
      %15 = vector.load %arg7[%c0_9, %c0_10] : memref<128x128xf32, #tpu.memory_space<vmem>>, vector<128x128xf32>
      %16 = arith.truncf %15 : vector<128x128xf32> to vector<128x128xbf16>
      %c0_11 = arith.constant 0 : index
      %c0_12 = arith.constant 0 : index
      %17 = vector.load %arg2[%c0_11, %c0_12] : memref<128x256xf32, #tpu.memory_space<vmem>>, vector<128x256xf32>
      %c0_13 = arith.constant 0 : index
      %c0_14 = arith.constant 0 : index
      %18 = vector.load %arg5[%c0_13, %c0_14] : memref<128x256xbf16, #tpu.memory_space<vmem>>, vector<128x256xbf16>
      %cst_15 = arith.constant dense<0.000000e+00> : vector<128x256xf32>
      %19 = tpu.matmul %16, %18, %cst_15 {dimension_numbers = #tpu.dot_dimension_numbers<[1], [0], [0], [1], [0, 0, 1, 1], [], []>} : vector<128x128xbf16>, vector<128x256xbf16>, vector<128x256xf32> -> vector<128x256xf32>
      %20 = arith.addf %17, %19 : vector<128x256xf32>
      %cst_16 = arith.constant 0.000000e+00 : f32
      %21 = vector.broadcast %cst_16 : f32 to vector<128x256xf32>
      %22 = arith.maximumf %20, %21 : vector<128x256xf32>
      %23 = arith.truncf %22 : vector<128x256xf32> to vector<128x256xbf16>
      %c0_17 = arith.constant 0 : index
      %c0_18 = arith.constant 0 : index
      %24 = vector.load %arg6[%c0_17, %c0_18] : memref<128x256xbf16, #tpu.memory_space<vmem>>, vector<128x256xbf16>
      tpu.vector_store %arg6[%c0_17, %c0_18], %23 {strides = array<i32>} : memref<128x256xbf16, #tpu.memory_space<vmem>>, vector<128x256xbf16>,
    } else {
    }
    return
  }
  func.func @transform_0(%arg0: i32, %arg1: i32) -> (i32, i32) {
    %c0_i32 = arith.constant 0 : i32
    %c0_i32_0 = arith.constant 0 : i32
    return %arg0, %c0_i32 : i32, i32
  }
  func.func @transform_1(%arg0: i32, %arg1: i32) -> (i32, i32) {
    %c0_i32 = arith.constant 0 : i32
    return %arg0, %arg1 : i32, i32
  }
  func.func @transform_2(%arg0: i32, %arg1: i32) -> (i32, i32) {
    %c0_i32 = arith.constant 0 : i32
    %c0_i32_0 = arith.constant 0 : i32
    %c0_i32_1 = arith.constant 0 : i32
    return %c0_i32, %c0_i32_0 : i32, i32
  }
  func.func @transform_3(%arg0: i32, %arg1: i32) -> (i32, i32) {
    %c0_i32 = arith.constant 0 : i32
    %c0_i32_0 = arith.constant 0 : i32
    %c0_i32_1 = arith.constant 0 : i32
    return %c0_i32, %c0_i32_0 : i32, i32
  }
  func.func @transform_4(%arg0: i32, %arg1: i32) -> (i32, i32) {
    %c0_i32 = arith.constant 0 : i32
    %c0_i32_0 = arith.constant 0 : i32
    return %arg0, %c0_i32 : i32, i32
  }
}

</mosaic_0001>

<llo_original>
// kernel: graphsage_forward.4
$region0: #{graphsage_forward.4}
  #allocation0 [shape = 'u32[]', space=smem, size = 0x4, offset = 0x4, fixed_abs, tag = 'smem constant byte address 0x4 - core index']
  #allocation1 [shape = 'u32[144,128]{1,0:T(1,128)}', space=vmem, size = 0x12000, scoped, tag = 'internal scratch']
  %s0 = inlined_call_operand.hbm [shape: bf16[128,128], index: 0, kind: input, shape index: {}]
  %s1 = inlined_call_operand.hbm [shape: bf16[128,256], index: 1, kind: input, shape index: {}]
  %s2 = inlined_call_operand.hbm [shape: f32[1,256], index: 2, kind: input, shape index: {}]
  %s3 = inlined_call_operand.vmem [shape: f32[128,256], index: 3, kind: output, shape index: {}]
  %s4 = sld [smem:[#allocation0]]
  $region34: #{graphsage_forward.4} parent=0
    _
  %s6 = ssub.s32 1, %s4
  %s7 = scalar_select 0, %s6, %s4
  $region1: #{graphsage_forward.4} parent=0
    #allocation2 [shape = 'u8[32768]{0}', space=vmem, size = 0x8000, scoped, tag = 'input window, operand 0, single buffered']
    #allocation3 [shape = 's32[1]{0}', space=sflag, size = 0x4, scoped, tag = 'scoped memory for graphsage_forward.4']
    #allocation4 [shape = 'u8[65536]{0}', space=vmem, size = 0x10000, scoped, tag = 'input window, operand 1, single buffered']
    #allocation5 [shape = 's32[1]{0}', space=sflag, size = 0x4, scoped, tag = 'scoped memory for graphsage_forward.4']
    #allocation6 [shape = 'u8[1024]{0}', space=vmem, size = 0x400, scoped, tag = 'input window, operand 2, single buffered']
    %8 = vsyncpa [#allocation3], 0
    %9 = vsyncpa [#allocation5], 0
    // Predicated region
    $region2: #{graphsage_forward.4} parent=1 // pred_check
      _
    $region3: #{graphsage_forward.4} parent=1 // pred_check_branch
      %11 = sbr.rel (0) target = $region5
    $region4: #{graphsage_forward.4} parent=1 // pred_region
      %s13 = ssub.s32 1024, 1024
      %14 = vsyncadd [#allocation3], %s13
      %s15 = sshll.u32 [#allocation2], 4
      %s16 = int_to_ptr.vmem [resolvable:$true] %s15
      %21 = dma.hbm_to_vmem [thread:$0]  %s0, 1024, %s16, [#allocation3], 64, 64, 4
    $region5: #{graphsage_forward.4} parent=1 // pred_fallthru
      _
    // Predicated region
    $region6: #{graphsage_forward.4} parent=1 // pred_check
      _
    $region7: #{graphsage_forward.4} parent=1 // pred_check_branch
      %23 = sbr.rel (0) target = $region9
    $region8: #{graphsage_forward.4} parent=1 // pred_region
      %s25 = ssub.s32 2048, 2048
      %26 = vsyncadd [#allocation5], %s25
      %s27 = sshll.u32 [#allocation4], 4
      %s28 = int_to_ptr.vmem [resolvable:$true] %s27
      %33 = dma.hbm_to_vmem [thread:$0]  %s1, 2048, %s28, [#allocation5], 128, 128, 8
    $region9: #{graphsage_forward.4} parent=1 // pred_fallthru
      _
    // Predicated region
    $region10: #{graphsage_forward.4} parent=1 // pred_check
      _
    $region11: #{graphsage_forward.4} parent=1 // pred_check_branch
      %35 = sbr.rel (0) target = $region13
    $region12: #{graphsage_forward.4} parent=1 // pred_region
      %s37 = ssub.s32 32, 32
      %38 = vsyncadd [#allocation5], %s37
      %s40 = sshll.u32 [#allocation6], 4
      %s41 = int_to_ptr.vmem [resolvable:$true] %s40
      %43 = dma.hbm_to_vmem [thread:$0]  %s2, 32, %s41, [#allocation5]
    $region13: #{graphsage_forward.4} parent=1 // pred_fallthru
      _
    // Predicated region
    $region14: #{graphsage_forward.4} parent=1 // pred_check
      _
    $region15: #{graphsage_forward.4} parent=1 // pred_check_branch
      %45 = sbr.rel (0) target = $region17
    $region16: #{graphsage_forward.4} parent=1 // pred_region
      %46 = dma.done [#allocation3], 1024
    $region17: #{graphsage_forward.4} parent=1 // pred_fallthru
      _
    // Predicated region
    $region18: #{graphsage_forward.4} parent=1 // pred_check
      _
    $region19: #{graphsage_forward.4} parent=1 // pred_check_branch
      %48 = sbr.rel (0) target = $region21
    $region20: #{graphsage_forward.4} parent=1 // pred_region
      %49 = dma.done [#allocation5], 2048
    $region21: #{graphsage_forward.4} parent=1 // pred_fallthru
      _
    // Predicated region
    $region22: #{graphsage_forward.4} parent=1 // pred_check
      _
    $region23: #{graphsage_forward.4} parent=1 // pred_check_branch
      %51 = sbr.rel (0) target = $region25
    $region24: #{graphsage_forward.4} parent=1 // pred_region
      %52 = dma.done [#allocation5], 32
    $region25: #{graphsage_forward.4} parent=1 // pred_fallthru
      _
    %v54 = vld [vmem:[#allocation2] sm:$0xf]
    %v55 = vld [vmem:[#allocation2 + $0x4] sm:$0xf]
    %v56 = vld [vmem:[#allocation2 + $0x8] sm:$0xf]
    %v57 = vld [vmem:[#allocation2 + $0xc] sm:$0xf]
    %v58 = vld [vmem:[#allocation2 + $0x10] sm:$0xf]
    %v59 = vld [vmem:[#allocation2 + $0x14] sm:$0xf]
    %v60 = vld [vmem:[#allocation2 + $0x18] sm:$0xf]
    %v61 = vld [vmem:[#allocation2 + $0x1c] sm:$0xf]
    %v62 = vld [vmem:[#allocation2 + $0x20] sm:$0xf]
    %v63 = vld [vmem:[#allocation2 + $0x24] sm:$0xf]
    %v64 = vld [vmem:[#allocation2 + $0x28] sm:$0xf]
    %v65 = vld [vmem:[#allocation2 + $0x2c] sm:$0xf]
    %v66 = vld [vmem:[#allocation2 + $0x30] sm:$0xf]
    %v67 = vld [vmem:[#allocation2 + $0x34] sm:$0xf]
    %v68 = vld [vmem:[#allocation2 + $0x38] sm:$0xf]
    %v69 = vld [vmem:[#allocation2 + $0x3c] sm:$0xf]
    %v70 = vld [vmem:[#allocation4] sm:$0xff]
    %v71 = vld [vmem:[#allocation4 + $0x8] sm:$0xff]
    %v72 = vld [vmem:[#allocation4 + $0x10] sm:$0xff]
    %v73 = vld [vmem:[#allocation4 + $0x18] sm:$0xff]
    %v74 = vld [vmem:[#allocation4 + $0x20] sm:$0xff]
    %v75 = vld [vmem:[#allocation4 + $0x28] sm:$0xff]
    %v76 = vld [vmem:[#allocation4 + $0x30] sm:$0xff]
    %v77 = vld [vmem:[#allocation4 + $0x38] sm:$0xff]
    %v78 = vld [vmem:[#allocation4 + $0x40] sm:$0xff]
    %v79 = vld [vmem:[#allocation4 + $0x48] sm:$0xff]
    %v80 = vld [vmem:[#allocation4 + $0x50] sm:$0xff]
    %v81 = vld [vmem:[#allocation4 + $0x58] sm:$0xff]
    %v82 = vld [vmem:[#allocation4 + $0x60] sm:$0xff]
    %v83 = vld [vmem:[#allocation4 + $0x68] sm:$0xff]
    %v84 = vld [vmem:[#allocation4 + $0x70] sm:$0xff]
    %v85 = vld [vmem:[#allocation4 + $0x78] sm:$0xff]
    %v86 = vld [vmem:[#allocation6] sm:$0x3]
    %v88 = vlaneseq
    %v89 = vshrl.u32 %v88, 7
    %v90 = vsub.s32 0, %v89
    %v91 = vrot.slane %v86, %v90
    %v92 = vlaneseq
    %v93 = vshrl.u32 %v92, 7
    %v94 = vsub.s32 1, %v93
    %v95 = vrot.slane %v86, %v94
    %v114 = vunpack.c.l.b16 %v54
    %v115 = vunpack.c.l.b16 %v55
    %v116 = vunpack.c.l.b16 %v56
    %v117 = vunpack.c.l.b16 %v57
    %v118 = vunpack.c.l.b16 %v58
    %v119 = vunpack.c.l.b16 %v59
    %v120 = vunpack.c.l.b16 %v60
    %v121 = vunpack.c.l.b16 %v61
    %v122 = vunpack.c.l.b16 %v62
    %v123 = vunpack.c.l.b16 %v63
    %v124 = vunpack.c.l.b16 %v64
    %v125 = vunpack.c.l.b16 %v65
    %v126 = vunpack.c.l.b16 %v66
    %v127 = vunpack.c.l.b16 %v67
    %v128 = vunpack.c.l.b16 %v68
    %v129 = vunpack.c.l.b16 %v69
    %v130 = vpack.c.b16 %v115, %v114
    %v131 = vpack.c.b16 %v117, %v116
    %v132 = vpack.c.b16 %v119, %v118
    %v133 = vpack.c.b16 %v121, %v120
    %v134 = vpack.c.b16 %v123, %v122
    %v135 = vpack.c.b16 %v125, %v124
    %v136 = vpack.c.b16 %v127, %v126
    %v137 = vpack.c.b16 %v129, %v128
    %v162 = vunpack.c.l.b16 %v70
    %v163 = vunpack.c.h.b16 %v70
    %v164 = vunpack.c.l.b16 %v71
    %v165 = vunpack.c.h.b16 %v71
    %v166 = vunpack.c.l.b16 %v72
    %v167 = vunpack.c.h.b16 %v72
    %v168 = vunpack.c.l.b16 %v73
    %v169 = vunpack.c.h.b16 %v73
    %v170 = vunpack.c.l.b16 %v74
    %v171 = vunpack.c.h.b16 %v74
    %v172 = vunpack.c.l.b16 %v75
    %v173 = vunpack.c.h.b16 %v75
    %v174 = vunpack.c.l.b16 %v76
    %v175 = vunpack.c.h.b16 %v76
    %v176 = vunpack.c.l.b16 %v77
    %v177 = vunpack.c.h.b16 %v77
    %v178 = vunpack.c.l.b16 %v78
    %v179 = vunpack.c.h.b16 %v78
    %v180 = vunpack.c.l.b16 %v79
    %v181 = vunpack.c.h.b16 %v79
    %v182 = vunpack.c.l.b16 %v80
    %v183 = vunpack.c.h.b16 %v80
    %v184 = vunpack.c.l.b16 %v81
    %v185 = vunpack.c.h.b16 %v81
    %v186 = vunpack.c.l.b16 %v82
    %v187 = vunpack.c.h.b16 %v82
    %v188 = vunpack.c.l.b16 %v83
    %v189 = vunpack.c.h.b16 %v83
    %v190 = vunpack.c.l.b16 %v84
    %v191 = vunpack.c.h.b16 %v84
    %v192 = vunpack.c.l.b16 %v85
    %v193 = vunpack.c.h.b16 %v85
    %v194 = vpack.c.b16 %v164, %v162
    %v195 = vpack.c.b16 %v165, %v163
    %v196 = vpack.c.b16 %v168, %v166
    %v197 = vpack.c.b16 %v169, %v167
    %v198 = vpack.c.b16 %v172, %v170
    %v199 = vpack.c.b16 %v173, %v171
    %v200 = vpack.c.b16 %v176, %v174
    %v201 = vpack.c.b16 %v177, %v175
    %v202 = vpack.c.b16 %v180, %v178
    %v203 = vpack.c.b16 %v181, %v179
    %v204 = vpack.c.b16 %v184, %v182
    %v205 = vpack.c.b16 %v185, %v183
    %v206 = vpack.c.b16 %v188, %v186
    %v207 = vpack.c.b16 %v189, %v187
    %v208 = vpack.c.b16 %v192, %v190
    %v209 = vpack.c.b16 %v193, %v191
    %226 = vmatprep.subr.bf16.mxu0 %v209
    %227 = vmatpush1.bf16.msra.mxu0 %v208
    %228 = vmatprep.subr.bf16.mxu0 %v207
    %229 = vmatpush1.bf16.msra.mxu0 %v206
    %230 = vmatprep.subr.bf16.mxu0 %v205
    %231 = vmatpush1.bf16.msra.mxu0 %v204
    %232 = vmatprep.subr.bf16.mxu0 %v203
    %233 = vmatpush1.bf16.msra.mxu0 %v202
    %234 = vmatprep.subr.bf16.mxu0 %v201
    %235 = vmatpush1.bf16.msra.mxu0 %v200
    %236 = vmatprep.subr.bf16.mxu0 %v199
    %237 = vmatpush1.bf16.msra.mxu0 %v198
    %238 = vmatprep.subr.bf16.mxu0 %v197
    %239 = vmatpush1.bf16.msra.mxu0 %v196
    %240 = vmatprep.subr.bf16.mxu0 %v195
    %241 = vmatpush1.bf16.msra.mxu0 %v194
    %242 = vmatprep.subr.bf16.mxu0 0
    %243 = vmatpush2.bf16.msra.mxu0 0
    %244 = vmatprep.subr.bf16.mxu0 0
    %245 = vmatpush2.bf16.msra.mxu0 0
    %246 = vmatprep.subr.bf16.mxu0 0
    %247 = vmatpush2.bf16.msra.mxu0 0
    %248 = vmatprep.subr.bf16.mxu0 0
    %249 = vmatpush2.bf16.msra.mxu0 0
    %250 = vmatprep.subr.bf16.mxu0 0
    %251 = vmatpush2.bf16.msra.mxu0 0
    %252 = vmatprep.subr.bf16.mxu0 0
    %253 = vmatpush2.bf16.msra.mxu0 0
    %254 = vmatprep.subr.bf16.mxu0 0
    %255 = vmatpush2.bf16.msra.mxu0 0
    %256 = vmatprep.subr.bf16.mxu0 0
    %257 = vmatpush2.bf16.msra.mxu0 0
    %258 = vmatprep.mubr.bf16.mxu0 0
    %259 = vmatmul.mubr.bf16.gmra.mxu0 %v130
    %v260 = vpop.f32.mrf.mxu0
    %v261 = vadd.f32 %v91, %v260
    %v262 = vpop.f32.mrf.mxu0
    %v263 = vadd.f32 %v95, %v262
    %v264 = vpop.f32.mrf.mxu0
    %v265 = vadd.f32 %v91, %v264
    %v266 = vpop.f32.mrf.mxu0
    %v267 = vadd.f32 %v95, %v266
    %268 = vmatprep.mubr.bf16.mxu0 0
    %269 = vmatmul.mubr.bf16.gmra.mxu0 %v131
    %v270 = vpop.f32.mrf.mxu0
    %v271 = vadd.f32 %v91, %v270
    %v272 = vpop.f32.mrf.mxu0
    %v273 = vadd.f32 %v95, %v272
    %v274 = vpop.f32.mrf.mxu0
    %v275 = vadd.f32 %v91, %v274
    %v276 = vpop.f32.mrf.mxu0
    %v277 = vadd.f32 %v95, %v276
    %278 = vmatprep.mubr.bf16.mxu0 0
    %279 = vmatmul.mubr.bf16.gmra.mxu0 %v132
    %v280 = vpop.f32.mrf.mxu0
    %v281 = vadd.f32 %v91, %v280
    %v282 = vpop.f32.mrf.mxu0
    %v283 = vadd.f32 %v95, %v282
    %v284 = vpop.f32.mrf.mxu0
    %v285 = vadd.f32 %v91, %v284
    %v286 = vpop.f32.mrf.mxu0
    %v287 = vadd.f32 %v95, %v286
    %288 = vmatprep.mubr.bf16.mxu0 0
    %289 = vmatmul.mubr.bf16.gmra.mxu0 %v133
    %v290 = vpop.f32.mrf.mxu0
    %v291 = vadd.f32 %v91, %v290
    %v292 = vpop.f32.mrf.mxu0
    %v293 = vadd.f32 %v95, %v292
    %v294 = vpop.f32.mrf.mxu0
    %v295 = vadd.f32 %v91, %v294
    %v296 = vpop.f32.mrf.mxu0
    %v297 = vadd.f32 %v95, %v296
    %298 = vmatprep.mubr.bf16.mxu0 0
    %299 = vmatmul.mubr.bf16.gmra.mxu0 %v134
    %v300 = vpop.f32.mrf.mxu0
    %v301 = vadd.f32 %v91, %v300
    %v302 = vpop.f32.mrf.mxu0
    %v303 = vadd.f32 %v95, %v302
    %v304 = vpop.f32.mrf.mxu0
    %v305 = vadd.f32 %v91, %v304
    %v306 = vpop.f32.mrf.mxu0
    %v307 = vadd.f32 %v95, %v306
    %308 = vmatprep.mubr.bf16.mxu0 0
    %309 = vmatmul.mubr.bf16.gmra.mxu0 %v135
    %v310 = vpop.f32.mrf.mxu0
    %v311 = vadd.f32 %v91, %v310
    %v312 = vpop.f32.mrf.mxu0
    %v313 = vadd.f32 %v95, %v312
    %v314 = vpop.f32.mrf.mxu0
    %v315 = vadd.f32 %v91, %v314
    %v316 = vpop.f32.mrf.mxu0
    %v317 = vadd.f32 %v95, %v316
    %318 = vmatprep.mubr.bf16.mxu0 0
    %319 = vmatmul.mubr.bf16.gmra.mxu0 %v136
    %v320 = vpop.f32.mrf.mxu0
    %v321 = vadd.f32 %v91, %v320
    %v322 = vpop.f32.mrf.mxu0
    %v323 = vadd.f32 %v95, %v322
    %v324 = vpop.f32.mrf.mxu0
    %v325 = vadd.f32 %v91, %v324
    %v326 = vpop.f32.mrf.mxu0
    %v327 = vadd.f32 %v95, %v326
    %328 = vmatprep.mubr.bf16.mxu0 0
    %329 = vmatmul.mubr.bf16.gmra.mxu0 %v137
    %v330 = vpop.f32.mrf.mxu0
    %v331 = vadd.f32 %v91, %v330
    %v332 = vpop.f32.mrf.mxu0
    %v333 = vadd.f32 %v95, %v332
    %v334 = vpop.f32.mrf.mxu0
    %v335 = vadd.f32 %v91, %v334
    %v336 = vpop.f32.mrf.mxu0
    %v337 = vadd.f32 %v95, %v336
    %338 = vdwg.mxu0
    %339 = vst [vmem:[%s3] sm:$0xff] %v261
    %340 = vst [vmem:[%s3 + $0x8] sm:$0xff] %v263
    %341 = vst [vmem:[%s3 + $0x10] sm:$0xff] %v265
    %342 = vst [vmem:[%s3 + $0x18] sm:$0xff] %v267
    %343 = vst [vmem:[%s3 + $0x20] sm:$0xff] %v271
    %344 = vst [vmem:[%s3 + $0x28] sm:$0xff] %v273
    %345 = vst [vmem:[%s3 + $0x30] sm:$0xff] %v275
    %346 = vst [vmem:[%s3 + $0x38] sm:$0xff] %v277
    %347 = vst [vmem:[%s3 + $0x40] sm:$0xff] %v281
    %348 = vst [vmem:[%s3 + $0x48] sm:$0xff] %v283
    %349 = vst [vmem:[%s3 + $0x50] sm:$0xff] %v285
    %350 = vst [vmem:[%s3 + $0x58] sm:$0xff] %v287
    %351 = vst [vmem:[%s3 + $0x60] sm:$0xff] %v291
    %352 = vst [vmem:[%s3 + $0x68] sm:$0xff] %v293
    %353 = vst [vmem:[%s3 + $0x70] sm:$0xff] %v295
    %354 = vst [vmem:[%s3 + $0x78] sm:$0xff] %v297
    %355 = vst [vmem:[%s3 + $0x80] sm:$0xff] %v301
    %356 = vst [vmem:[%s3 + $0x88] sm:$0xff] %v303
    %357 = vst [vmem:[%s3 + $0x90] sm:$0xff] %v305
    %358 = vst [vmem:[%s3 + $0x98] sm:$0xff] %v307
    %359 = vst [vmem:[%s3 + $0xa0] sm:$0xff] %v311
    %360 = vst [vmem:[%s3 + $0xa8] sm:$0xff] %v313
    %361 = vst [vmem:[%s3 + $0xb0] sm:$0xff] %v315
    %362 = vst [vmem:[%s3 + $0xb8] sm:$0xff] %v317
    %363 = vst [vmem:[%s3 + $0xc0] sm:$0xff] %v321
    %364 = vst [vmem:[%s3 + $0xc8] sm:$0xff] %v323
    %365 = vst [vmem:[%s3 + $0xd0] sm:$0xff] %v325
    %366 = vst [vmem:[%s3 + $0xd8] sm:$0xff] %v327
    %367 = vst [vmem:[%s3 + $0xe0] sm:$0xff] %v331
    %368 = vst [vmem:[%s3 + $0xe8] sm:$0xff] %v333
    %369 = vst [vmem:[%s3 + $0xf0] sm:$0xff] %v335
    %370 = vst [vmem:[%s3 + $0xf8] sm:$0xff] %v337
    // Predicated region
    $region26: #{graphsage_forward.4} parent=1 // pred_check
      _
    $region27: #{graphsage_forward.4} parent=1 // pred_check_branch
      %372 = sbr.rel (0) target = $region29
    $region28: #{graphsage_forward.4} parent=1 // pred_region
      _
    $region29: #{graphsage_forward.4} parent=1 // pred_fallthru
      _
    // Predicated region
    $region30: #{graphsage_forward.4} parent=1 // pred_check
      _
    $region31: #{graphsage_forward.4} parent=1 // pred_check_branch
      %374 = sbr.rel (0) target = $region33
    $region32: #{graphsage_forward.4} parent=1 // pred_region
      _
    $region33: #{graphsage_forward.4} parent=1 // pred_fallthru
      _
    %375 = vsyncpa [#allocation3], 1
    %376 = vsyncpa [#allocation5], 1

// kernel: graphsage_forward.7
$region0: #{graphsage_forward.7}
  #allocation0 [shape = 'u32[]', space=smem, size = 0x4, offset = 0x4, fixed_abs, tag = 'smem constant byte address 0x4 - core index']
  #allocation1 [shape = 'u32[144,128]{1,0:T(1,128)}', space=vmem, size = 0x12000, scoped, tag = 'internal scratch']
  #allocation2 [shape = 'f32[128,128]{1,0:T(8,128)}', space=vmem, size = 0x10000, scoped, tag = 'scratch operand']
  %s0 = inlined_call_operand.vmem [shape: f32[128,128], index: 0, kind: input, shape index: {}]
  %s1 = inlined_call_operand.vmem [shape: bf16[128,128], index: 1, kind: input, shape index: {}]
  %s2 = inlined_call_operand.vmem [shape: bf16[128,128], index: 2, kind: input, shape index: {}]
  %s3 = inlined_call_operand.hbm [shape: f32[128,128], index: 3, kind: output, shape index: {}]
  %s4 = sld [smem:[#allocation0]]
  $region30: #{graphsage_forward.7} parent=0
    _
  %s6 = ssub.s32 1, %s4
  %s7 = scalar_select 0, %s6, %s4
  $region1: #{graphsage_forward.7} parent=0
    #allocation3 [shape = 'u8[65536]{0}', space=vmem, size = 0x10000, scoped, tag = 'output window, operand 0, single buffered']
    #allocation4 [shape = 's32[1]{0}', space=sflag, size = 0x4, scoped, tag = 'scoped memory for graphsage_forward.7']
    %8 = vsyncpa [#allocation4], 0
    // Predicated region
    $region2: #{graphsage_forward.7} parent=1 // pred_check
      _
    $region3: #{graphsage_forward.7} parent=1 // pred_check_branch
      %10 = sbr.rel (0) target = $region5
    $region4: #{graphsage_forward.7} parent=1 // pred_region
      _
    $region5: #{graphsage_forward.7} parent=1 // pred_fallthru
      _
    // Predicated region
    $region6: #{graphsage_forward.7} parent=1 // pred_check
      _
    $region7: #{graphsage_forward.7} parent=1 // pred_check_branch
      %12 = sbr.rel (0) target = $region9
    $region8: #{graphsage_forward.7} parent=1 // pred_region
      _
    $region9: #{graphsage_forward.7} parent=1 // pred_fallthru
      _
    // Predicated region
    $region10: #{graphsage_forward.7} parent=1 // pred_check
      _
    $region11: #{graphsage_forward.7} parent=1 // pred_check_branch
      %14 = sbr.rel (0) target = $region13
    $region12: #{graphsage_forward.7} parent=1 // pred_region
      _
    $region13: #{graphsage_forward.7} parent=1 // pred_fallthru
      _
    %p16 = scmp.eq.s32.totalorder 0, 0
    // Predicated region
    $region14: #{graphsage_forward.7} parent=1 // pred_check
      %p17 = pneg %p16
    $region15: #{graphsage_forward.7} parent=1 // pred_check_branch
      %19 = sbr.rel (%p17) target = $region17
    $region16: #{graphsage_forward.7} parent=1 // pred_region
      %v20 = vld [vmem:[%s0] sm:$0xff]
      %v21 = vld [vmem:[%s0 + $0x8] sm:$0xff]
      %v22 = vld [vmem:[%s0 + $0x10] sm:$0xff]
      %v23 = vld [vmem:[%s0 + $0x18] sm:$0xff]
      %v24 = vld [vmem:[%s0 + $0x20] sm:$0xff]
      %v25 = vld [vmem:[%s0 + $0x28] sm:$0xff]
      %v26 = vld [vmem:[%s0 + $0x30] sm:$0xff]
      %v27 = vld [vmem:[%s0 + $0x38] sm:$0xff]
      %v28 = vld [vmem:[%s0 + $0x40] sm:$0xff]
      %v29 = vld [vmem:[%s0 + $0x48] sm:$0xff]
      %v30 = vld [vmem:[%s0 + $0x50] sm:$0xff]
      %v31 = vld [vmem:[%s0 + $0x58] sm:$0xff]
      %v32 = vld [vmem:[%s0 + $0x60] sm:$0xff]
      %v33 = vld [vmem:[%s0 + $0x68] sm:$0xff]
      %v34 = vld [vmem:[%s0 + $0x70] sm:$0xff]
      %v35 = vld [vmem:[%s0 + $0x78] sm:$0xff]
      %36 = vst [vmem:[#allocation2] sm:$0xff] %v20
      %37 = vst [vmem:[#allocation2 + $0x8] sm:$0xff] %v21
      %38 = vst [vmem:[#allocation2 + $0x10] sm:$0xff] %v22
      %39 = vst [vmem:[#allocation2 + $0x18] sm:$0xff] %v23
      %40 = vst [vmem:[#allocation2 + $0x20] sm:$0xff] %v24
      %41 = vst [vmem:[#allocation2 + $0x28] sm:$0xff] %v25
      %42 = vst [vmem:[#allocation2 + $0x30] sm:$0xff] %v26
      %43 = vst [vmem:[#allocation2 + $0x38] sm:$0xff] %v27
      %44 = vst [vmem:[#allocation2 + $0x40] sm:$0xff] %v28
      %45 = vst [vmem:[#allocation2 + $0x48] sm:$0xff] %v29
      %46 = vst [vmem:[#allocation2 + $0x50] sm:$0xff] %v30
      %47 = vst [vmem:[#allocation2 + $0x58] sm:$0xff] %v31
      %48 = vst [vmem:[#allocation2 + $0x60] sm:$0xff] %v32
      %49 = vst [vmem:[#allocation2 + $0x68] sm:$0xff] %v33
      %50 = vst [vmem:[#allocation2 + $0x70] sm:$0xff] %v34
      %51 = vst [vmem:[#allocation2 + $0x78] sm:$0xff] %v35
    $region17: #{graphsage_forward.7} parent=1 // pred_fallthru
      _
    %s52 = smul.u32 0, 128
    %s53 = sshra.s32 %s52, 3
    %s54 = sand.u32 %s52, 7
    %s55 = smul.addr %s53, 4
    %s56 = scalar_lea.vmem %s2, %s55
    %v57 = vld [vmem:[%s56] sm:$0xf]
    %v58 = vld [vmem:[%s56 + $0x4] sm:$0xf]
    %v59 = vld [vmem:[%s56 + $0x8] sm:$0xf]
    %v60 = vld [vmem:[%s56 + $0xc] sm:$0xf]
    %v61 = vld [vmem:[%s56 + $0x10] sm:$0xf]
    %v62 = vld [vmem:[%s56 + $0x14] sm:$0xf]
    %v63 = vld [vmem:[%s56 + $0x18] sm:$0xf]
    %v64 = vld [vmem:[%s56 + $0x1c] sm:$0xf]
    %v65 = vld [vmem:[%s56 + $0x20] sm:$0xf]
    %v66 = vld [vmem:[%s56 + $0x24] sm:$0xf]
    %v67 = vld [vmem:[%s56 + $0x28] sm:$0xf]
    %v68 = vld [vmem:[%s56 + $0x2c] sm:$0xf]
    %v69 = vld [vmem:[%s56 + $0x30] sm:$0xf]
    %v70 = vld [vmem:[%s56 + $0x34] sm:$0xf]
    %v71 = vld [vmem:[%s56 + $0x38] sm:$0xf]
    %v72 = vld [vmem:[%s56 + $0x3c] sm:$0xf]
    %v73 = vld [vmem:[#allocation2] sm:$0xff]
    %v74 = vld [vmem:[#allocation2 + $0x8] sm:$0xff]
    %v75 = vld [vmem:[#allocation2 + $0x10] sm:$0xff]
    %v76 = vld [vmem:[#allocation2 + $0x18] sm:$0xff]
    %v77 = vld [vmem:[#allocation2 + $0x20] sm:$0xff]
    %v78 = vld [vmem:[#allocation2 + $0x28] sm:$0xff]
    %v79 = vld [vmem:[#allocation2 + $0x30] sm:$0xff]
    %v80 = vld [vmem:[#allocation2 + $0x38] sm:$0xff]
    %v81 = vld [vmem:[#allocation2 + $0x40] sm:$0xff]
    %v82 = vld [vmem:[#allocation2 + $0x48] sm:$0xff]
    %v83 = vld [vmem:[#allocation2 + $0x50] sm:$0xff]
    %v84 = vld [vmem:[#allocation2 + $0x58] sm:$0xff]
    %v85 = vld [vmem:[#allocation2 + $0x60] sm:$0xff]
    %v86 = vld [vmem:[#allocation2 + $0x68] sm:$0xff]
    %v87 = vld [vmem:[#allocation2 + $0x70] sm:$0xff]
    %v88 = vld [vmem:[#allocation2 + $0x78] sm:$0xff]
    %v89 = vld [vmem:[%s1] sm:$0xf]
    %v90 = vld [vmem:[%s1 + $0x4] sm:$0xf]
    %v91 = vld [vmem:[%s1 + $0x8] sm:$0xf]
    %v92 = vld [vmem:[%s1 + $0xc] sm:$0xf]
    %v93 = vld [vmem:[%s1 + $0x10] sm:$0xf]
    %v94 = vld [vmem:[%s1 + $0x14] sm:$0xf]
    %v95 = vld [vmem:[%s1 + $0x18] sm:$0xf]
    %v96 = vld [vmem:[%s1 + $0x1c] sm:$0xf]
    %v97 = vld [vmem:[%s1 + $0x20] sm:$0xf]
    %v98 = vld [vmem:[%s1 + $0x24] sm:$0xf]
    %v99 = vld [vmem:[%s1 + $0x28] sm:$0xf]
    %v100 = vld [vmem:[%s1 + $0x2c] sm:$0xf]
    %v101 = vld [vmem:[%s1 + $0x30] sm:$0xf]
    %v102 = vld [vmem:[%s1 + $0x34] sm:$0xf]
    %v103 = vld [vmem:[%s1 + $0x38] sm:$0xf]
    %v104 = vld [vmem:[%s1 + $0x3c] sm:$0xf]
    %v121 = vunpack.c.l.b16 %v89
    %v122 = vunpack.c.l.b16 %v90
    %v123 = vunpack.c.l.b16 %v91
    %v124 = vunpack.c.l.b16 %v92
    %v125 = vunpack.c.l.b16 %v93
    %v126 = vunpack.c.l.b16 %v94
    %v127 = vunpack.c.l.b16 %v95
    %v128 = vunpack.c.l.b16 %v96
    %v129 = vunpack.c.l.b16 %v97
    %v130 = vunpack.c.l.b16 %v98
    %v131 = vunpack.c.l.b16 %v99
    %v132 = vunpack.c.l.b16 %v100
    %v133 = vunpack.c.l.b16 %v101
    %v134 = vunpack.c.l.b16 %v102
    %v135 = vunpack.c.l.b16 %v103
    %v136 = vunpack.c.l.b16 %v104
    %v137 = vpack.c.b16 %v122, %v121
    %v138 = vpack.c.b16 %v124, %v123
    %v139 = vpack.c.b16 %v126, %v125
    %v140 = vpack.c.b16 %v128, %v127
    %v141 = vpack.c.b16 %v130, %v129
    %v142 = vpack.c.b16 %v132, %v131
    %v143 = vpack.c.b16 %v134, %v133
    %v144 = vpack.c.b16 %v136, %v135
    %v169 = vunpack.c.l.b16 %v57
    %v170 = vunpack.c.l.b16 %v58
    %v171 = vunpack.c.l.b16 %v59
    %v172 = vunpack.c.l.b16 %v60
    %v173 = vunpack.c.l.b16 %v61
    %v174 = vunpack.c.l.b16 %v62
    %v175 = vunpack.c.l.b16 %v63
    %v176 = vunpack.c.l.b16 %v64
    %v177 = vunpack.c.l.b16 %v65
    %v178 = vunpack.c.l.b16 %v66
    %v179 = vunpack.c.l.b16 %v67
    %v180 = vunpack.c.l.b16 %v68
    %v181 = vunpack.c.l.b16 %v69
    %v182 = vunpack.c.l.b16 %v70
    %v183 = vunpack.c.l.b16 %v71
    %v184 = vunpack.c.l.b16 %v72
    %v185 = vpack.c.b16 %v170, %v169
    %v186 = vpack.c.b16 %v172, %v171
    %v187 = vpack.c.b16 %v174, %v173
    %v188 = vpack.c.b16 %v176, %v175
    %v189 = vpack.c.b16 %v178, %v177
    %v190 = vpack.c.b16 %v180, %v179
    %v191 = vpack.c.b16 %v182, %v181
    %v192 = vpack.c.b16 %v184, %v183
    %201 = vmatprep.subr.bf16.mxu0 0
    %202 = vmatpush1.bf16.msra.mxu0 %v192
    %203 = vmatprep.subr.bf16.mxu0 0
    %204 = vmatpush1.bf16.msra.mxu0 %v191
    %205 = vmatprep.subr.bf16.mxu0 0
    %206 = vmatpush1.bf16.msra.mxu0 %v190
    %207 = vmatprep.subr.bf16.mxu0 0
    %208 = vmatpush1.bf16.msra.mxu0 %v189
    %209 = vmatprep.subr.bf16.mxu0 0
    %210 = vmatpush1.bf16.msra.mxu0 %v188
    %211 = vmatprep.subr.bf16.mxu0 0
    %212 = vmatpush1.bf16.msra.mxu0 %v187
    %213 = vmatprep.subr.bf16.mxu0 0
    %214 = vmatpush1.bf16.msra.mxu0 %v186
    %215 = vmatprep.subr.bf16.mxu0 0
    %216 = vmatpush1.bf16.msra.mxu0 %v185
    %217 = vmatprep.subr.bf16.mxu0 0
    %218 = vmatpush2.bf16.msra.mxu0 0
    %219 = vmatprep.subr.bf16.mxu0 0
    %220 = vmatpush2.bf16.msra.mxu0 0
    %221 = vmatprep.subr.bf16.mxu0 0
    %222 = vmatpush2.bf16.msra.mxu0 0
    %223 = vmatprep.subr.bf16.mxu0 0
    %224 = vmatpush2.bf16.msra.mxu0 0
    %225 = vmatprep.subr.bf16.mxu0 0
    %226 = vmatpush2.bf16.msra.mxu0 0
    %227 = vmatprep.subr.bf16.mxu0 0
    %228 = vmatpush2.bf16.msra.mxu0 0
    %229 = vmatprep.subr.bf16.mxu0 0
    %230 = vmatpush2.bf16.msra.mxu0 0
    %231 = vmatprep.subr.bf16.mxu0 0
    %232 = vmatpush2.bf16.msra.mxu0 0
    %233 = vmatprep.mubr.bf16.mxu0 0
    %234 = vmatmul.mubr.bf16.gmra.mxu0 %v137
    %v235 = vpop.f32.mrf.mxu0
    %v236 = vadd.f32 0.0, %v235
    %v237 = vpop.f32.mrf.mxu0
    %v238 = vpop.f32.mrf.mxu0
    %v239 = vadd.f32 0.0, %v238
    %v240 = vpop.f32.mrf.mxu0
    %241 = vmatprep.mubr.bf16.mxu0 0
    %242 = vmatmul.mubr.bf16.gmra.mxu0 %v138
    %v243 = vpop.f32.mrf.mxu0
    %v244 = vadd.f32 0.0, %v243
    %v245 = vpop.f32.mrf.mxu0
    %v246 = vpop.f32.mrf.mxu0
    %v247 = vadd.f32 0.0, %v246
    %v248 = vpop.f32.mrf.mxu0
    %249 = vmatprep.mubr.bf16.mxu0 0
    %250 = vmatmul.mubr.bf16.gmra.mxu0 %v139
    %v251 = vpop.f32.mrf.mxu0
    %v252 = vadd.f32 0.0, %v251
    %v253 = vpop.f32.mrf.mxu0
    %v254 = vpop.f32.mrf.mxu0
    %v255 = vadd.f32 0.0, %v254
    %v256 = vpop.f32.mrf.mxu0
    %257 = vmatprep.mubr.bf16.mxu0 0
    %258 = vmatmul.mubr.bf16.gmra.mxu0 %v140
    %v259 = vpop.f32.mrf.mxu0
    %v260 = vadd.f32 0.0, %v259
    %v261 = vpop.f32.mrf.mxu0
    %v262 = vpop.f32.mrf.mxu0
    %v263 = vadd.f32 0.0, %v262
    %v264 = vpop.f32.mrf.mxu0
    %265 = vmatprep.mubr.bf16.mxu0 0
    %266 = vmatmul.mubr.bf16.gmra.mxu0 %v141
    %v267 = vpop.f32.mrf.mxu0
    %v268 = vadd.f32 0.0, %v267
    %v269 = vpop.f32.mrf.mxu0
    %v270 = vpop.f32.mrf.mxu0
    %v271 = vadd.f32 0.0, %v270
    %v272 = vpop.f32.mrf.mxu0
    %273 = vmatprep.mubr.bf16.mxu0 0
    %274 = vmatmul.mubr.bf16.gmra.mxu0 %v142
    %v275 = vpop.f32.mrf.mxu0
    %v276 = vadd.f32 0.0, %v275
    %v277 = vpop.f32.mrf.mxu0
    %v278 = vpop.f32.mrf.mxu0
    %v279 = vadd.f32 0.0, %v278
    %v280 = vpop.f32.mrf.mxu0
    %281 = vmatprep.mubr.bf16.mxu0 0
    %282 = vmatmul.mubr.bf16.gmra.mxu0 %v143
    %v283 = vpop.f32.mrf.mxu0
    %v284 = vadd.f32 0.0, %v283
    %v285 = vpop.f32.mrf.mxu0
    %v286 = vpop.f32.mrf.mxu0
    %v287 = vadd.f32 0.0, %v286
    %v288 = vpop.f32.mrf.mxu0
    %289 = vmatprep.mubr.bf16.mxu0 0
    %290 = vmatmul.mubr.bf16.gmra.mxu0 %v144
    %v291 = vpop.f32.mrf.mxu0
    %v292 = vadd.f32 0.0, %v291
    %v293 = vpop.f32.mrf.mxu0
    %v294 = vpop.f32.mrf.mxu0
    %v295 = vadd.f32 0.0, %v294
    %v296 = vpop.f32.mrf.mxu0
    %297 = vdwg.mxu0
    %v298 = vadd.f32 %v73, %v236
    %v299 = vadd.f32 %v74, %v239
    %v300 = vadd.f32 %v75, %v244
    %v301 = vadd.f32 %v76, %v247
    %v302 = vadd.f32 %v77, %v252
    %v303 = vadd.f32 %v78, %v255
    %v304 = vadd.f32 %v79, %v260
    %v305 = vadd.f32 %v80, %v263
    %v306 = vadd.f32 %v81, %v268
    %v307 = vadd.f32 %v82, %v271
    %v308 = vadd.f32 %v83, %v276
    %v309 = vadd.f32 %v84, %v279
    %v310 = vadd.f32 %v85, %v284
    %v311 = vadd.f32 %v86, %v287
    %v312 = vadd.f32 %v87, %v292
    %v313 = vadd.f32 %v88, %v295
    %314 = vst [vmem:[#allocation2] sm:$0xff] %v298
    %315 = vst [vmem:[#allocation2 + $0x8] sm:$0xff] %v299
    %316 = vst [vmem:[#allocation2 + $0x10] sm:$0xff] %v300
    %317 = vst [vmem:[#allocation2 + $0x18] sm:$0xff] %v301
    %318 = vst [vmem:[#allocation2 + $0x20] sm:$0xff] %v302
    %319 = vst [vmem:[#allocation2 + $0x28] sm:$0xff] %v303
    %320 = vst [vmem:[#allocation2 + $0x30] sm:$0xff] %v304
    %321 = vst [vmem:[#allocation2 + $0x38] sm:$0xff] %v305
    %322 = vst [vmem:[#allocation2 + $0x40] sm:$0xff] %v306
    %323 = vst [vmem:[#allocation2 + $0x48] sm:$0xff] %v307
    %324 = vst [vmem:[#allocation2 + $0x50] sm:$0xff] %v308
    %325 = vst [vmem:[#allocation2 + $0x58] sm:$0xff] %v309
    %326 = vst [vmem:[#allocation2 + $0x60] sm:$0xff] %v310
    %327 = vst [vmem:[#allocation2 + $0x68] sm:$0xff] %v311
    %328 = vst [vmem:[#allocation2 + $0x70] sm:$0xff] %v312
    %329 = vst [vmem:[#allocation2 + $0x78] sm:$0xff] %v313
    // Predicated region
    $region18: #{graphsage_forward.7} parent=1 // pred_check
      %p330 = pneg %p16
    $region19: #{graphsage_forward.7} parent=1 // pred_check_branch
      %332 = sbr.rel (%p330) target = $region21
    $region20: #{graphsage_forward.7} parent=1 // pred_region
      %v333 = vld [vmem:[#allocation2] sm:$0xff]
      %v334 = vld [vmem:[#allocation2 + $0x8] sm:$0xff]
      %v335 = vld [vmem:[#allocation2 + $0x10] sm:$0xff]
      %v336 = vld [vmem:[#allocation2 + $0x18] sm:$0xff]
      %v337 = vld [vmem:[#allocation2 + $0x20] sm:$0xff]
      %v338 = vld [vmem:[#allocation2 + $0x28] sm:$0xff]
      %v339 = vld [vmem:[#allocation2 + $0x30] sm:$0xff]
      %v340 = vld [vmem:[#allocation2 + $0x38] sm:$0xff]
      %v341 = vld [vmem:[#allocation2 + $0x40] sm:$0xff]
      %v342 = vld [vmem:[#allocation2 + $0x48] sm:$0xff]
      %v343 = vld [vmem:[#allocation2 + $0x50] sm:$0xff]
      %v344 = vld [vmem:[#allocation2 + $0x58] sm:$0xff]
      %v345 = vld [vmem:[#allocation2 + $0x60] sm:$0xff]
      %v346 = vld [vmem:[#allocation2 + $0x68] sm:$0xff]
      %v347 = vld [vmem:[#allocation2 + $0x70] sm:$0xff]
      %v348 = vld [vmem:[#allocation2 + $0x78] sm:$0xff]
      %v349 = vmax.f32 %v333, 0.0
      %v350 = vmax.f32 %v334, 0.0
      %v351 = vmax.f32 %v335, 0.0
      %v352 = vmax.f32 %v336, 0.0
      %v353 = vmax.f32 %v337, 0.0
      %v354 = vmax.f32 %v338, 0.0
      %v355 = vmax.f32 %v339, 0.0
      %v356 = vmax.f32 %v340, 0.0
      %v357 = vmax.f32 %v341, 0.0
      %v358 = vmax.f32 %v342, 0.0
      %v359 = vmax.f32 %v343, 0.0
      %v360 = vmax.f32 %v344, 0.0
      %v361 = vmax.f32 %v345, 0.0
      %v362 = vmax.f32 %v346, 0.0
      %v363 = vmax.f32 %v347, 0.0
      %v364 = vmax.f32 %v348, 0.0
      %365 = vst [vmem:[#allocation3] sm:$0xff] %v349
      %366 = vst [vmem:[#allocation3 + $0x8] sm:$0xff] %v350
      %367 = vst [vmem:[#allocation3 + $0x10] sm:$0xff] %v351
      %368 = vst [vmem:[#allocation3 + $0x18] sm:$0xff] %v352
      %369 = vst [vmem:[#allocation3 + $0x20] sm:$0xff] %v353
      %370 = vst [vmem:[#allocation3 + $0x28] sm:$0xff] %v354
      %371 = vst [vmem:[#allocation3 + $0x30] sm:$0xff] %v355
      %372 = vst [vmem:[#allocation3 + $0x38] sm:$0xff] %v356
      %373 = vst [vmem:[#allocation3 + $0x40] sm:$0xff] %v357
      %374 = vst [vmem:[#allocation3 + $0x48] sm:$0xff] %v358
      %375 = vst [vmem:[#allocation3 + $0x50] sm:$0xff] %v359
      %376 = vst [vmem:[#allocation3 + $0x58] sm:$0xff] %v360
      %377 = vst [vmem:[#allocation3 + $0x60] sm:$0xff] %v361
      %378 = vst [vmem:[#allocation3 + $0x68] sm:$0xff] %v362
      %379 = vst [vmem:[#allocation3 + $0x70] sm:$0xff] %v363
      %380 = vst [vmem:[#allocation3 + $0x78] sm:$0xff] %v364
    $region21: #{graphsage_forward.7} parent=1 // pred_fallthru
      _
    // Predicated region
    $region22: #{graphsage_forward.7} parent=1 // pred_check
      _
    $region23: #{graphsage_forward.7} parent=1 // pred_check_branch
      %382 = sbr.rel (0) target = $region25
    $region24: #{graphsage_forward.7} parent=1 // pred_region
      %s384 = ssub.s32 2048, 2048
      %385 = vsyncadd [#allocation4], %s384
      %s386 = sshll.u32 [#allocation3], 4
      %s387 = int_to_ptr.vmem [resolvable:$true] %s386
      %392 = dma.vmem_to_hbm [thread:$0]  %s387, 2048, %s3, [#allocation4], 128, 128, 8
    $region25: #{graphsage_forward.7} parent=1 // pred_fallthru
      _
    // Predicated region
    $region26: #{graphsage_forward.7} parent=1 // pred_check
      _
    $region27: #{graphsage_forward.7} parent=1 // pred_check_branch
      %394 = sbr.rel (0) target = $region29
    $region28: #{graphsage_forward.7} parent=1 // pred_region
      %395 = dma.done [#allocation4], 2048
    $region29: #{graphsage_forward.7} parent=1 // pred_fallthru
      _
    %396 = vsyncpa [#allocation4], 1

// kernel: graphsage_forward.6
$region0: #{graphsage_forward.6}
  #allocation0 [shape = 'u32[]', space=smem, size = 0x4, offset = 0x4, fixed_abs, tag = 'smem constant byte address 0x4 - core index']
  #allocation1 [shape = 'u32[144,128]{1,0:T(1,128)}', space=vmem, size = 0x12000, scoped, tag = 'internal scratch']
  %s0 = inlined_call_operand.vmem [shape: bf16[128,256], index: 0, kind: input, shape index: {}]
  %s1 = inlined_call_operand.vmem [shape: bf16[256,128], index: 1, kind: input, shape index: {}]
  %s2 = inlined_call_operand.vmem [shape: bf16[256,128], index: 2, kind: input, shape index: {}]
  %s3 = inlined_call_operand.vmem [shape: f32[1,128], index: 3, kind: input, shape index: {}]
  %s4 = inlined_call_operand.vmem [shape: f32[128,128], index: 4, kind: output, shape index: {0}]
  %s5 = inlined_call_operand.vmem [shape: bf16[128,128], index: 5, kind: output, shape index: {1}]
  %6 = xla_tuple %s4, %s5
  %s7 = sld [smem:[#allocation0]]
  $region34: #{graphsage_forward.6} parent=0
    _
  %s9 = ssub.s32 1, %s7
  %s10 = scalar_select 0, %s9, %s7
  // Predicated region
  $region2: #{graphsage_forward.6} parent=0 // pred_check
    _
  $region3: #{graphsage_forward.6} parent=0 // pred_check_branch
    %12 = sbr.rel (0) target = $region5
  $region4: #{graphsage_forward.6} parent=0 // pred_region
    _
  $region5: #{graphsage_forward.6} parent=0 // pred_fallthru
    _
  // Predicated region
  $region6: #{graphsage_forward.6} parent=0 // pred_check
    _
  $region7: #{graphsage_forward.6} parent=0 // pred_check_branch
    %14 = sbr.rel (0) target = $region9
  $region8: #{graphsage_forward.6} parent=0 // pred_region
    _
  $region9: #{graphsage_forward.6} parent=0 // pred_fallthru
    _
  // Predicated region
  $region10: #{graphsage_forward.6} parent=0 // pred_check
    _
  $region11: #{graphsage_forward.6} parent=0 // pred_check_branch
    %16 = sbr.rel (0) target = $region13
  $region12: #{graphsage_forward.6} parent=0 // pred_region
    _
  $region13: #{graphsage_forward.6} parent=0 // pred_fallthru
    _
  // Predicated region
  $region14: #{graphsage_forward.6} parent=0 // pred_check
    _
  $region15: #{graphsage_forward.6} parent=0 // pred_check_branch
    %18 = sbr.rel (0) target = $region17
  $region16: #{graphsage_forward.6} parent=0 // pred_region
    _
  $region17: #{graphsage_forward.6} parent=0 // pred_fallthru
    _
  %v20 = vld [vmem:[%s0] sm:$0xff]
  %v21 = vld [vmem:[%s0 + $0x8] sm:$0xff]
  %v22 = vld [vmem:[%s0 + $0x10] sm:$0xff]
  %v23 = vld [vmem:[%s0 + $0x18] sm:$0xff]
  %v24 = vld [vmem:[%s0 + $0x20] sm:$0xff]
  %v25 = vld [vmem:[%s0 + $0x28] sm:$0xff]
  %v26 = vld [vmem:[%s0 + $0x30] sm:$0xff]
  %v27 = vld [vmem:[%s0 + $0x38] sm:$0xff]
  %v28 = vld [vmem:[%s0 + $0x40] sm:$0xff]
  %v29 = vld [vmem:[%s0 + $0x48] sm:$0xff]
  %v30 = vld [vmem:[%s0 + $0x50] sm:$0xff]
  %v31 = vld [vmem:[%s0 + $0x58] sm:$0xff]
  %v32 = vld [vmem:[%s0 + $0x60] sm:$0xff]
  %v33 = vld [vmem:[%s0 + $0x68] sm:$0xff]
  %v34 = vld [vmem:[%s0 + $0x70] sm:$0xff]
  %v35 = vld [vmem:[%s0 + $0x78] sm:$0xff]
  %v36 = vld [vmem:[%s1] sm:$0xf]
  %v37 = vld [vmem:[%s1 + $0x4] sm:$0xf]
  %v38 = vld [vmem:[%s1 + $0x8] sm:$0xf]
  %v39 = vld [vmem:[%s1 + $0xc] sm:$0xf]
  %v40 = vld [vmem:[%s1 + $0x10] sm:$0xf]
  %v41 = vld [vmem:[%s1 + $0x14] sm:$0xf]
  %v42 = vld [vmem:[%s1 + $0x18] sm:$0xf]
  %v43 = vld [vmem:[%s1 + $0x1c] sm:$0xf]
  %v44 = vld [vmem:[%s1 + $0x20] sm:$0xf]
  %v45 = vld [vmem:[%s1 + $0x24] sm:$0xf]
  %v46 = vld [vmem:[%s1 + $0x28] sm:$0xf]
  %v47 = vld [vmem:[%s1 + $0x2c] sm:$0xf]
  %v48 = vld [vmem:[%s1 + $0x30] sm:$0xf]
  %v49 = vld [vmem:[%s1 + $0x34] sm:$0xf]
  %v50 = vld [vmem:[%s1 + $0x38] sm:$0xf]
  %v51 = vld [vmem:[%s1 + $0x3c] sm:$0xf]
  %v52 = vld [vmem:[%s1 + $0x40] sm:$0xf]
  %v53 = vld [vmem:[%s1 + $0x44] sm:$0xf]
  %v54 = vld [vmem:[%s1 + $0x48] sm:$0xf]
  %v55 = vld [vmem:[%s1 + $0x4c] sm:$0xf]
  %v56 = vld [vmem:[%s1 + $0x50] sm:$0xf]
  %v57 = vld [vmem:[%s1 + $0x54] sm:$0xf]
  %v58 = vld [vmem:[%s1 + $0x58] sm:$0xf]
  %v59 = vld [vmem:[%s1 + $0x5c] sm:$0xf]
  %v60 = vld [vmem:[%s1 + $0x60] sm:$0xf]
  %v61 = vld [vmem:[%s1 + $0x64] sm:$0xf]
  %v62 = vld [vmem:[%s1 + $0x68] sm:$0xf]
  %v63 = vld [vmem:[%s1 + $0x6c] sm:$0xf]
  %v64 = vld [vmem:[%s1 + $0x70] sm:$0xf]
  %v65 = vld [vmem:[%s1 + $0x74] sm:$0xf]
  %v66 = vld [vmem:[%s1 + $0x78] sm:$0xf]
  %v67 = vld [vmem:[%s1 + $0x7c] sm:$0xf]
  %v68 = vld [vmem:[%s3] sm:$0x1]
  %v70 = vlaneseq
  %v71 = vshrl.u32 %v70, 7
  %v72 = vsub.s32 0, %v71
  %v73 = vrot.slane %v68, %v72
  %v91 = vunpack.c.l.b16 %v20
  %v92 = vunpack.c.h.b16 %v20
  %v93 = vunpack.c.l.b16 %v21
  %v94 = vunpack.c.h.b16 %v21
  %v95 = vunpack.c.l.b16 %v22
  %v96 = vunpack.c.h.b16 %v22
  %v97 = vunpack.c.l.b16 %v23
  %v98 = vunpack.c.h.b16 %v23
  %v99 = vunpack.c.l.b16 %v24
  %v100 = vunpack.c.h.b16 %v24
  %v101 = vunpack.c.l.b16 %v25
  %v102 = vunpack.c.h.b16 %v25
  %v103 = vunpack.c.l.b16 %v26
  %v104 = vunpack.c.h.b16 %v26
  %v105 = vunpack.c.l.b16 %v27
  %v106 = vunpack.c.h.b16 %v27
  %v107 = vunpack.c.l.b16 %v28
  %v108 = vunpack.c.h.b16 %v28
  %v109 = vunpack.c.l.b16 %v29
  %v110 = vunpack.c.h.b16 %v29
  %v111 = vunpack.c.l.b16 %v30
  %v112 = vunpack.c.h.b16 %v30
  %v113 = vunpack.c.l.b16 %v31
  %v114 = vunpack.c.h.b16 %v31
  %v115 = vunpack.c.l.b16 %v32
  %v116 = vunpack.c.h.b16 %v32
  %v117 = vunpack.c.l.b16 %v33
  %v118 = vunpack.c.h.b16 %v33
  %v119 = vunpack.c.l.b16 %v34
  %v120 = vunpack.c.h.b16 %v34
  %v121 = vunpack.c.l.b16 %v35
  %v122 = vunpack.c.h.b16 %v35
  %v123 = vpack.c.b16 %v93, %v91
  %v124 = vpack.c.b16 %v94, %v92
  %v125 = vpack.c.b16 %v97, %v95
  %v126 = vpack.c.b16 %v98, %v96
  %v127 = vpack.c.b16 %v101, %v99
  %v128 = vpack.c.b16 %v102, %v100
  %v129 = vpack.c.b16 %v105, %v103
  %v130 = vpack.c.b16 %v106, %v104
  %v131 = vpack.c.b16 %v109, %v107
  %v132 = vpack.c.b16 %v110, %v108
  %v133 = vpack.c.b16 %v113, %v111
  %v134 = vpack.c.b16 %v114, %v112
  %v135 = vpack.c.b16 %v117, %v115
  %v136 = vpack.c.b16 %v118, %v116
  %v137 = vpack.c.b16 %v121, %v119
  %v138 = vpack.c.b16 %v122, %v120
  %v187 = vunpack.c.l.b16 %v36
  %v188 = vunpack.c.l.b16 %v37
  %v189 = vunpack.c.l.b16 %v38
  %v190 = vunpack.c.l.b16 %v39
  %v191 = vunpack.c.l.b16 %v40
  %v192 = vunpack.c.l.b16 %v41
  %v193 = vunpack.c.l.b16 %v42
  %v194 = vunpack.c.l.b16 %v43
  %v195 = vunpack.c.l.b16 %v44
  %v196 = vunpack.c.l.b16 %v45
  %v197 = vunpack.c.l.b16 %v46
  %v198 = vunpack.c.l.b16 %v47
  %v199 = vunpack.c.l.b16 %v48
  %v200 = vunpack.c.l.b16 %v49
  %v201 = vunpack.c.l.b16 %v50
  %v202 = vunpack.c.l.b16 %v51
  %v203 = vunpack.c.l.b16 %v52
  %v204 = vunpack.c.l.b16 %v53
  %v205 = vunpack.c.l.b16 %v54
  %v206 = vunpack.c.l.b16 %v55
  %v207 = vunpack.c.l.b16 %v56
  %v208 = vunpack.c.l.b16 %v57
  %v209 = vunpack.c.l.b16 %v58
  %v210 = vunpack.c.l.b16 %v59
  %v211 = vunpack.c.l.b16 %v60
  %v212 = vunpack.c.l.b16 %v61
  %v213 = vunpack.c.l.b16 %v62
  %v214 = vunpack.c.l.b16 %v63
  %v215 = vunpack.c.l.b16 %v64
  %v216 = vunpack.c.l.b16 %v65
  %v217 = vunpack.c.l.b16 %v66
  %v218 = vunpack.c.l.b16 %v67
  %v219 = vpack.c.b16 %v188, %v187
  %v220 = vpack.c.b16 %v190, %v189
  %v221 = vpack.c.b16 %v192, %v191
  %v222 = vpack.c.b16 %v194, %v193
  %v223 = vpack.c.b16 %v196, %v195
  %v224 = vpack.c.b16 %v198, %v197
  %v225 = vpack.c.b16 %v200, %v199
  %v226 = vpack.c.b16 %v202, %v201
  %v227 = vpack.c.b16 %v204, %v203
  %v228 = vpack.c.b16 %v206, %v205
  %v229 = vpack.c.b16 %v208, %v207
  %v230 = vpack.c.b16 %v210, %v209
  %v231 = vpack.c.b16 %v212, %v211
  %v232 = vpack.c.b16 %v214, %v213
  %v233 = vpack.c.b16 %v216, %v215
  %v234 = vpack.c.b16 %v218, %v217
  %251 = vmatprep.subr.bf16.mxu0 0
  %252 = vmatpush1.bf16.msra.mxu0 %v226
  %253 = vmatprep.subr.bf16.mxu0 0
  %254 = vmatpush1.bf16.msra.mxu0 %v225
  %255 = vmatprep.subr.bf16.mxu0 0
  %256 = vmatpush1.bf16.msra.mxu0 %v224
  %257 = vmatprep.subr.bf16.mxu0 0
  %258 = vmatpush1.bf16.msra.mxu0 %v223
  %259 = vmatprep.subr.bf16.mxu0 0
  %260 = vmatpush1.bf16.msra.mxu0 %v222
  %261 = vmatprep.subr.bf16.mxu0 0
  %262 = vmatpush1.bf16.msra.mxu0 %v221
  %263 = vmatprep.subr.bf16.mxu0 0
  %264 = vmatpush1.bf16.msra.mxu0 %v220
  %265 = vmatprep.subr.bf16.mxu0 0
  %266 = vmatpush1.bf16.msra.mxu0 %v219
  %267 = vmatprep.subr.bf16.mxu0 0
  %268 = vmatpush2.bf16.msra.mxu0 %v234
  %269 = vmatprep.subr.bf16.mxu0 0
  %270 = vmatpush2.bf16.msra.mxu0 %v233
  %271 = vmatprep.subr.bf16.mxu0 0
  %272 = vmatpush2.bf16.msra.mxu0 %v232
  %273 = vmatprep.subr.bf16.mxu0 0
  %274 = vmatpush2.bf16.msra.mxu0 %v231
  %275 = vmatprep.subr.bf16.mxu0 0
  %276 = vmatpush2.bf16.msra.mxu0 %v230
  %277 = vmatprep.subr.bf16.mxu0 0
  %278 = vmatpush2.bf16.msra.mxu0 %v229
  %279 = vmatprep.subr.bf16.mxu0 0
  %280 = vmatpush2.bf16.msra.mxu0 %v228
  %281 = vmatprep.subr.bf16.mxu0 0
  %282 = vmatpush2.bf16.msra.mxu0 %v227
  %283 = vmatprep.mubr.bf16.mxu0 %v124
  %284 = vmatmul.mubr.bf16.gmra.mxu0 %v123
  %v285 = vpop.f32.mrf.mxu0
  %v286 = vadd.f32 %v73, %v285
  %v287 = vpop.f32.mrf.mxu0
  %v288 = vpop.f32.mrf.mxu0
  %v289 = vadd.f32 %v73, %v288
  %v290 = vpop.f32.mrf.mxu0
  %291 = vmatprep.mubr.bf16.mxu0 %v126
  %292 = vmatmul.mubr.bf16.gmra.mxu0 %v125
  %v293 = vpop.f32.mrf.mxu0
  %v294 = vadd.f32 %v73, %v293
  %v295 = vpop.f32.mrf.mxu0
  %v296 = vpop.f32.mrf.mxu0
  %v297 = vadd.f32 %v73, %v296
  %v298 = vpop.f32.mrf.mxu0
  %299 = vmatprep.mubr.bf16.mxu0 %v128
  %300 = vmatmul.mubr.bf16.gmra.mxu0 %v127
  %v301 = vpop.f32.mrf.mxu0
  %v302 = vadd.f32 %v73, %v301
  %v303 = vpop.f32.mrf.mxu0
  %v304 = vpop.f32.mrf.mxu0
  %v305 = vadd.f32 %v73, %v304
  %v306 = vpop.f32.mrf.mxu0
  %307 = vmatprep.mubr.bf16.mxu0 %v130
  %308 = vmatmul.mubr.bf16.gmra.mxu0 %v129
  %v309 = vpop.f32.mrf.mxu0
  %v310 = vadd.f32 %v73, %v309
  %v311 = vpop.f32.mrf.mxu0
  %v312 = vpop.f32.mrf.mxu0
  %v313 = vadd.f32 %v73, %v312
  %v314 = vpop.f32.mrf.mxu0
  %315 = vmatprep.mubr.bf16.mxu0 %v132
  %316 = vmatmul.mubr.bf16.gmra.mxu0 %v131
  %v317 = vpop.f32.mrf.mxu0
  %v318 = vadd.f32 %v73, %v317
  %v319 = vpop.f32.mrf.mxu0
  %v320 = vpop.f32.mrf.mxu0
  %v321 = vadd.f32 %v73, %v320
  %v322 = vpop.f32.mrf.mxu0
  %323 = vmatprep.mubr.bf16.mxu0 %v134
  %324 = vmatmul.mubr.bf16.gmra.mxu0 %v133
  %v325 = vpop.f32.mrf.mxu0
  %v326 = vadd.f32 %v73, %v325
  %v327 = vpop.f32.mrf.mxu0
  %v328 = vpop.f32.mrf.mxu0
  %v329 = vadd.f32 %v73, %v328
  %v330 = vpop.f32.mrf.mxu0
  %331 = vmatprep.mubr.bf16.mxu0 %v136
  %332 = vmatmul.mubr.bf16.gmra.mxu0 %v135
  %v333 = vpop.f32.mrf.mxu0
  %v334 = vadd.f32 %v73, %v333
  %v335 = vpop.f32.mrf.mxu0
  %v336 = vpop.f32.mrf.mxu0
  %v337 = vadd.f32 %v73, %v336
  %v338 = vpop.f32.mrf.mxu0
  %339 = vmatprep.mubr.bf16.mxu0 %v138
  %340 = vmatmul.mubr.bf16.gmra.mxu0 %v137
  %v341 = vpop.f32.mrf.mxu0
  %v342 = vadd.f32 %v73, %v341
  %v343 = vpop.f32.mrf.mxu0
  %v344 = vpop.f32.mrf.mxu0
  %v345 = vadd.f32 %v73, %v344
  %v346 = vpop.f32.mrf.mxu0
  %347 = vdwg.mxu0
  %348 = vst [vmem:[%s4] sm:$0xff] %v286
  %349 = vst [vmem:[%s4 + $0x8] sm:$0xff] %v289
  %350 = vst [vmem:[%s4 + $0x10] sm:$0xff] %v294
  %351 = vst [vmem:[%s4 + $0x18] sm:$0xff] %v297
  %352 = vst [vmem:[%s4 + $0x20] sm:$0xff] %v302
  %353 = vst [vmem:[%s4 + $0x28] sm:$0xff] %v305
  %354 = vst [vmem:[%s4 + $0x30] sm:$0xff] %v310
  %355 = vst [vmem:[%s4 + $0x38] sm:$0xff] %v313
  %356 = vst [vmem:[%s4 + $0x40] sm:$0xff] %v318
  %357 = vst [vmem:[%s4 + $0x48] sm:$0xff] %v321
  %358 = vst [vmem:[%s4 + $0x50] sm:$0xff] %v326
  %359 = vst [vmem:[%s4 + $0x58] sm:$0xff] %v329
  %360 = vst [vmem:[%s4 + $0x60] sm:$0xff] %v334
  %361 = vst [vmem:[%s4 + $0x68] sm:$0xff] %v337
  %362 = vst [vmem:[%s4 + $0x70] sm:$0xff] %v342
  %363 = vst [vmem:[%s4 + $0x78] sm:$0xff] %v345
  %v364 = vld [vmem:[%s2] sm:$0xf]
  %v365 = vld [vmem:[%s2 + $0x4] sm:$0xf]
  %v366 = vld [vmem:[%s2 + $0x8] sm:$0xf]
  %v367 = vld [vmem:[%s2 + $0xc] sm:$0xf]
  %v368 = vld [vmem:[%s2 + $0x10] sm:$0xf]
  %v369 = vld [vmem:[%s2 + $0x14] sm:$0xf]
  %v370 = vld [vmem:[%s2 + $0x18] sm:$0xf]
  %v371 = vld [vmem:[%s2 + $0x1c] sm:$0xf]
  %v372 = vld [vmem:[%s2 + $0x20] sm:$0xf]
  %v373 = vld [vmem:[%s2 + $0x24] sm:$0xf]
  %v374 = vld [vmem:[%s2 + $0x28] sm:$0xf]
  %v375 = vld [vmem:[%s2 + $0x2c] sm:$0xf]
  %v376 = vld [vmem:[%s2 + $0x30] sm:$0xf]
  %v377 = vld [vmem:[%s2 + $0x34] sm:$0xf]
  %v378 = vld [vmem:[%s2 + $0x38] sm:$0xf]
  %v379 = vld [vmem:[%s2 + $0x3c] sm:$0xf]
  %v380 = vld [vmem:[%s2 + $0x40] sm:$0xf]
  %v381 = vld [vmem:[%s2 + $0x44] sm:$0xf]
  %v382 = vld [vmem:[%s2 + $0x48] sm:$0xf]
  %v383 = vld [vmem:[%s2 + $0x4c] sm:$0xf]
  %v384 = vld [vmem:[%s2 + $0x50] sm:$0xf]
  %v385 = vld [vmem:[%s2 + $0x54] sm:$0xf]
  %v386 = vld [vmem:[%s2 + $0x58] sm:$0xf]
  %v387 = vld [vmem:[%s2 + $0x5c] sm:$0xf]
  %v388 = vld [vmem:[%s2 + $0x60] sm:$0xf]
  %v389 = vld [vmem:[%s2 + $0x64] sm:$0xf]
  %v390 = vld [vmem:[%s2 + $0x68] sm:$0xf]
  %v391 = vld [vmem:[%s2 + $0x6c] sm:$0xf]
  %v392 = vld [vmem:[%s2 + $0x70] sm:$0xf]
  %v393 = vld [vmem:[%s2 + $0x74] sm:$0xf]
  %v394 = vld [vmem:[%s2 + $0x78] sm:$0xf]
  %v395 = vld [vmem:[%s2 + $0x7c] sm:$0xf]
  %v428 = vunpack.c.l.b16 %v364
  %v429 = vunpack.c.l.b16 %v365
  %v430 = vunpack.c.l.b16 %v366
  %v431 = vunpack.c.l.b16 %v367
  %v432 = vunpack.c.l.b16 %v368
  %v433 = vunpack.c.l.b16 %v369
  %v434 = vunpack.c.l.b16 %v370
  %v435 = vunpack.c.l.b16 %v371
  %v436 = vunpack.c.l.b16 %v372
  %v437 = vunpack.c.l.b16 %v373
  %v438 = vunpack.c.l.b16 %v374
  %v439 = vunpack.c.l.b16 %v375
  %v440 = vunpack.c.l.b16 %v376
  %v441 = vunpack.c.l.b16 %v377
  %v442 = vunpack.c.l.b16 %v378
  %v443 = vunpack.c.l.b16 %v379
  %v444 = vunpack.c.l.b16 %v380
  %v445 = vunpack.c.l.b16 %v381
  %v446 = vunpack.c.l.b16 %v382
  %v447 = vunpack.c.l.b16 %v383
  %v448 = vunpack.c.l.b16 %v384
  %v449 = vunpack.c.l.b16 %v385
  %v450 = vunpack.c.l.b16 %v386
  %v451 = vunpack.c.l.b16 %v387
  %v452 = vunpack.c.l.b16 %v388
  %v453 = vunpack.c.l.b16 %v389
  %v454 = vunpack.c.l.b16 %v390
  %v455 = vunpack.c.l.b16 %v391
  %v456 = vunpack.c.l.b16 %v392
  %v457 = vunpack.c.l.b16 %v393
  %v458 = vunpack.c.l.b16 %v394
  %v459 = vunpack.c.l.b16 %v395
  %v460 = vpack.c.b16 %v429, %v428
  %v461 = vpack.c.b16 %v431, %v430
  %v462 = vpack.c.b16 %v433, %v432
  %v463 = vpack.c.b16 %v435, %v434
  %v464 = vpack.c.b16 %v437, %v436
  %v465 = vpack.c.b16 %v439, %v438
  %v466 = vpack.c.b16 %v441, %v440
  %v467 = vpack.c.b16 %v443, %v442
  %v468 = vpack.c.b16 %v445, %v444
  %v469 = vpack.c.b16 %v447, %v446
  %v470 = vpack.c.b16 %v449, %v448
  %v471 = vpack.c.b16 %v451, %v450
  %v472 = vpack.c.b16 %v453, %v452
  %v473 = vpack.c.b16 %v455, %v454
  %v474 = vpack.c.b16 %v457, %v456
  %v475 = vpack.c.b16 %v459, %v458
  %492 = vmatprep.subr.bf16.mxu0 0
  %493 = vmatpush1.bf16.msra.mxu0 %v467
  %494 = vmatprep.subr.bf16.mxu0 0
  %495 = vmatpush1.bf16.msra.mxu0 %v466
  %496 = vmatprep.subr.bf16.mxu0 0
  %497 = vmatpush1.bf16.msra.mxu0 %v465
  %498 = vmatprep.subr.bf16.mxu0 0
  %499 = vmatpush1.bf16.msra.mxu0 %v464
  %500 = vmatprep.subr.bf16.mxu0 0
  %501 = vmatpush1.bf16.msra.mxu0 %v463
  %502 = vmatprep.subr.bf16.mxu0 0
  %503 = vmatpush1.bf16.msra.mxu0 %v462
  %504 = vmatprep.subr.bf16.mxu0 0
  %505 = vmatpush1.bf16.msra.mxu0 %v461
  %506 = vmatprep.subr.bf16.mxu0 0
  %507 = vmatpush1.bf16.msra.mxu0 %v460
  %508 = vmatprep.subr.bf16.mxu0 0
  %509 = vmatpush2.bf16.msra.mxu0 %v475
  %510 = vmatprep.subr.bf16.mxu0 0
  %511 = vmatpush2.bf16.msra.mxu0 %v474
  %512 = vmatprep.subr.bf16.mxu0 0
  %513 = vmatpush2.bf16.msra.mxu0 %v473
  %514 = vmatprep.subr.bf16.mxu0 0
  %515 = vmatpush2.bf16.msra.mxu0 %v472
  %516 = vmatprep.subr.bf16.mxu0 0
  %517 = vmatpush2.bf16.msra.mxu0 %v471
  %518 = vmatprep.subr.bf16.mxu0 0
  %519 = vmatpush2.bf16.msra.mxu0 %v470
  %520 = vmatprep.subr.bf16.mxu0 0
  %521 = vmatpush2.bf16.msra.mxu0 %v469
  %522 = vmatprep.subr.bf16.mxu0 0
  %523 = vmatpush2.bf16.msra.mxu0 %v468
  %524 = vmatprep.mubr.bf16.mxu0 %v124
  %525 = vmatmul.mubr.bf16.gmra.mxu0 %v123
  %v526 = vpop.f32.mrf.mxu0
  %v527 = vadd.f32 0.0, %v526
  %v528 = vpop.f32.mrf.mxu0
  %v529 = vpop.f32.mrf.mxu0
  %v530 = vadd.f32 0.0, %v529
  %v531 = vpop.f32.mrf.mxu0
  %532 = vmatprep.mubr.bf16.mxu0 %v126
  %533 = vmatmul.mubr.bf16.gmra.mxu0 %v125
  %v534 = vpop.f32.mrf.mxu0
  %v535 = vadd.f32 0.0, %v534
  %v536 = vpop.f32.mrf.mxu0
  %v537 = vpop.f32.mrf.mxu0
  %v538 = vadd.f32 0.0, %v537
  %v539 = vpop.f32.mrf.mxu0
  %540 = vmatprep.mubr.bf16.mxu0 %v128
  %541 = vmatmul.mubr.bf16.gmra.mxu0 %v127
  %v542 = vpop.f32.mrf.mxu0
  %v543 = vadd.f32 0.0, %v542
  %v544 = vpop.f32.mrf.mxu0
  %v545 = vpop.f32.mrf.mxu0
  %v546 = vadd.f32 0.0, %v545
  %v547 = vpop.f32.mrf.mxu0
  %548 = vmatprep.mubr.bf16.mxu0 %v130
  %549 = vmatmul.mubr.bf16.gmra.mxu0 %v129
  %v550 = vpop.f32.mrf.mxu0
  %v551 = vadd.f32 0.0, %v550
  %v552 = vpop.f32.mrf.mxu0
  %v553 = vpop.f32.mrf.mxu0
  %v554 = vadd.f32 0.0, %v553
  %v555 = vpop.f32.mrf.mxu0
  %556 = vmatprep.mubr.bf16.mxu0 %v132
  %557 = vmatmul.mubr.bf16.gmra.mxu0 %v131
  %v558 = vpop.f32.mrf.mxu0
  %v559 = vadd.f32 0.0, %v558
  %v560 = vpop.f32.mrf.mxu0
  %v561 = vpop.f32.mrf.mxu0
  %v562 = vadd.f32 0.0, %v561
  %v563 = vpop.f32.mrf.mxu0
  %564 = vmatprep.mubr.bf16.mxu0 %v134
  %565 = vmatmul.mubr.bf16.gmra.mxu0 %v133
  %v566 = vpop.f32.mrf.mxu0
  %v567 = vadd.f32 0.0, %v566
  %v568 = vpop.f32.mrf.mxu0
  %v569 = vpop.f32.mrf.mxu0
  %v570 = vadd.f32 0.0, %v569
  %v571 = vpop.f32.mrf.mxu0
  %572 = vmatprep.mubr.bf16.mxu0 %v136
  %573 = vmatmul.mubr.bf16.gmra.mxu0 %v135
  %v574 = vpop.f32.mrf.mxu0
  %v575 = vadd.f32 0.0, %v574
  %v576 = vpop.f32.mrf.mxu0
  %v577 = vpop.f32.mrf.mxu0
  %v578 = vadd.f32 0.0, %v577
  %v579 = vpop.f32.mrf.mxu0
  %580 = vmatprep.mubr.bf16.mxu0 %v138
  %581 = vmatmul.mubr.bf16.gmra.mxu0 %v137
  %v582 = vpop.f32.mrf.mxu0
  %v583 = vadd.f32 0.0, %v582
  %v584 = vpop.f32.mrf.mxu0
  %v585 = vpop.f32.mrf.mxu0
  %v586 = vadd.f32 0.0, %v585
  %v587 = vpop.f32.mrf.mxu0
  %588 = vdwg.mxu0
  %v589 = vpack.c.bf16 %v530, %v527
  %v590 = vpack.c.bf16 %v538, %v535
  %v591 = vpack.c.bf16 %v546, %v543
  %v592 = vpack.c.bf16 %v554, %v551
  %v593 = vpack.c.bf16 %v562, %v559
  %v594 = vpack.c.bf16 %v570, %v567
  %v595 = vpack.c.bf16 %v578, %v575
  %v596 = vpack.c.bf16 %v586, %v583
  %v605 = vunpack.c.l.b16 %v589
  %v606 = vunpack.c.h.b16 %v589
  %v607 = vunpack.c.l.b16 %v590
  %v608 = vunpack.c.h.b16 %v590
  %v609 = vunpack.c.l.b16 %v591
  %v610 = vunpack.c.h.b16 %v591
  %v611 = vunpack.c.l.b16 %v592
  %v612 = vunpack.c.h.b16 %v592
  %v613 = vunpack.c.l.b16 %v593
  %v614 = vunpack.c.h.b16 %v593
  %v615 = vunpack.c.l.b16 %v594
  %v616 = vunpack.c.h.b16 %v594
  %v617 = vunpack.c.l.b16 %v595
  %v618 = vunpack.c.h.b16 %v595
  %v619 = vunpack.c.l.b16 %v596
  %v620 = vunpack.c.h.b16 %v596
  %v621 = vpack.c.b16 %v605, %v605
  %v622 = vpack.c.b16 %v606, %v606
  %v623 = vpack.c.b16 %v607, %v607
  %v624 = vpack.c.b16 %v608, %v608
  %v625 = vpack.c.b16 %v609, %v609
  %v626 = vpack.c.b16 %v610, %v610
  %v627 = vpack.c.b16 %v611, %v611
  %v628 = vpack.c.b16 %v612, %v612
  %v629 = vpack.c.b16 %v613, %v613
  %v630 = vpack.c.b16 %v614, %v614
  %v631 = vpack.c.b16 %v615, %v615
  %v632 = vpack.c.b16 %v616, %v616
  %v633 = vpack.c.b16 %v617, %v617
  %v634 = vpack.c.b16 %v618, %v618
  %v635 = vpack.c.b16 %v619, %v619
  %v636 = vpack.c.b16 %v620, %v620
  %653 = vst [vmem:[%s5] sm:$0xf] %v621
  %654 = vst [vmem:[%s5 + $0x4] sm:$0xf] %v622
  %655 = vst [vmem:[%s5 + $0x8] sm:$0xf] %v623
  %656 = vst [vmem:[%s5 + $0xc] sm:$0xf] %v624
  %657 = vst [vmem:[%s5 + $0x10] sm:$0xf] %v625
  %658 = vst [vmem:[%s5 + $0x14] sm:$0xf] %v626
  %659 = vst [vmem:[%s5 + $0x18] sm:$0xf] %v627
  %660 = vst [vmem:[%s5 + $0x1c] sm:$0xf] %v628
  %661 = vst [vmem:[%s5 + $0x20] sm:$0xf] %v629
  %662 = vst [vmem:[%s5 + $0x24] sm:$0xf] %v630
  %663 = vst [vmem:[%s5 + $0x28] sm:$0xf] %v631
  %664 = vst [vmem:[%s5 + $0x2c] sm:$0xf] %v632
  %665 = vst [vmem:[%s5 + $0x30] sm:$0xf] %v633
  %666 = vst [vmem:[%s5 + $0x34] sm:$0xf] %v634
  %667 = vst [vmem:[%s5 + $0x38] sm:$0xf] %v635
  %668 = vst [vmem:[%s5 + $0x3c] sm:$0xf] %v636
  // Predicated region
  $region18: #{graphsage_forward.6} parent=0 // pred_check
    _
  $region19: #{graphsage_forward.6} parent=0 // pred_check_branch
    %670 = sbr.rel (0) target = $region21
  $region20: #{graphsage_forward.6} parent=0 // pred_region
    _
  $region21: #{graphsage_forward.6} parent=0 // pred_fallthru
    _
  // Predicated region
  $region22: #{graphsage_forward.6} parent=0 // pred_check
    _
  $region23: #{graphsage_forward.6} parent=0 // pred_check_branch
    %672 = sbr.rel (0) target = $region25
  $region24: #{graphsage_forward.6} parent=0 // pred_region
    _
  $region25: #{graphsage_forward.6} parent=0 // pred_fallthru
    _
  // Predicated region
  $region26: #{graphsage_forward.6} parent=0 // pred_check
    _
  $region27: #{graphsage_forward.6} parent=0 // pred_check_branch
    %674 = sbr.rel (0) target = $region29
  $region28: #{graphsage_forward.6} parent=0 // pred_region
    _
  $region29: #{graphsage_forward.6} parent=0 // pred_fallthru
    _
  // Predicated region
  $region30: #{graphsage_forward.6} parent=0 // pred_check
    _
  $region31: #{graphsage_forward.6} parent=0 // pred_check_branch
    %676 = sbr.rel (0) target = $region33
  $region32: #{graphsage_forward.6} parent=0 // pred_region
    _
  $region33: #{graphsage_forward.6} parent=0 // pred_fallthru
    _

// kernel: graphsage_forward.5
$region0: #{graphsage_forward.5}
  #allocation0 [shape = 'u32[]', space=smem, size = 0x4, offset = 0x4, fixed_abs, tag = 'smem constant byte address 0x4 - core index']
  #allocation1 [shape = 'u32[144,128]{1,0:T(1,128)}', space=vmem, size = 0x12000, scoped, tag = 'internal scratch']
  #allocation2 [shape = 'f32[128,128]{1,0:T(8,128)}', space=vmem, size = 0x10000, scoped, tag = 'scratch operand']
  %s0 = inlined_call_operand.vmem [shape: f32[128,256], index: 0, kind: input, shape index: {}]
  %s1 = inlined_call_operand.vmem [shape: bf16[128,128], index: 1, kind: input, shape index: {}]
  %s2 = inlined_call_operand.vmem [shape: bf16[128,128], index: 2, kind: input, shape index: {}]
  %s3 = inlined_call_operand.vmem [shape: bf16[128,256], index: 3, kind: input, shape index: {}]
  %s4 = inlined_call_operand.vmem [shape: bf16[128,256], index: 4, kind: output, shape index: {}]
  %s5 = sld [smem:[#allocation0]]
  $region34: #{graphsage_forward.5} parent=0
    _
  %s7 = ssub.s32 1, %s5
  %s8 = scalar_select 0, %s7, %s5
  // Predicated region
  $region2: #{graphsage_forward.5} parent=0 // pred_check
    _
  $region3: #{graphsage_forward.5} parent=0 // pred_check_branch
    %10 = sbr.rel (0) target = $region5
  $region4: #{graphsage_forward.5} parent=0 // pred_region
    _
  $region5: #{graphsage_forward.5} parent=0 // pred_fallthru
    _
  // Predicated region
  $region6: #{graphsage_forward.5} parent=0 // pred_check
    _
  $region7: #{graphsage_forward.5} parent=0 // pred_check_branch
    %12 = sbr.rel (0) target = $region9
  $region8: #{graphsage_forward.5} parent=0 // pred_region
    _
  $region9: #{graphsage_forward.5} parent=0 // pred_fallthru
    _
  // Predicated region
  $region10: #{graphsage_forward.5} parent=0 // pred_check
    _
  $region11: #{graphsage_forward.5} parent=0 // pred_check_branch
    %14 = sbr.rel (0) target = $region13
  $region12: #{graphsage_forward.5} parent=0 // pred_region
    _
  $region13: #{graphsage_forward.5} parent=0 // pred_fallthru
    _
  // Predicated region
  $region14: #{graphsage_forward.5} parent=0 // pred_check
    _
  $region15: #{graphsage_forward.5} parent=0 // pred_check_branch
    %16 = sbr.rel (0) target = $region17
  $region16: #{graphsage_forward.5} parent=0 // pred_region
    _
  $region17: #{graphsage_forward.5} parent=0 // pred_fallthru
    _
  %p18 = scmp.eq.s32.totalorder 0, 0
  // Predicated region
  $region18: #{graphsage_forward.5} parent=0 // pred_check
    %p19 = pneg %p18
  $region19: #{graphsage_forward.5} parent=0 // pred_check_branch
    %21 = sbr.rel (%p19) target = $region21
  $region20: #{graphsage_forward.5} parent=0 // pred_region
    %22 = vst [vmem:[#allocation2] sm:$0xff] 0.0
    %23 = vst [vmem:[#allocation2 + $0x8] sm:$0xff] 0.0
    %24 = vst [vmem:[#allocation2 + $0x10] sm:$0xff] 0.0
    %25 = vst [vmem:[#allocation2 + $0x18] sm:$0xff] 0.0
    %26 = vst [vmem:[#allocation2 + $0x20] sm:$0xff] 0.0
    %27 = vst [vmem:[#allocation2 + $0x28] sm:$0xff] 0.0
    %28 = vst [vmem:[#allocation2 + $0x30] sm:$0xff] 0.0
    %29 = vst [vmem:[#allocation2 + $0x38] sm:$0xff] 0.0
    %30 = vst [vmem:[#allocation2 + $0x40] sm:$0xff] 0.0
    %31 = vst [vmem:[#allocation2 + $0x48] sm:$0xff] 0.0
    %32 = vst [vmem:[#allocation2 + $0x50] sm:$0xff] 0.0
    %33 = vst [vmem:[#allocation2 + $0x58] sm:$0xff] 0.0
    %34 = vst [vmem:[#allocation2 + $0x60] sm:$0xff] 0.0
    %35 = vst [vmem:[#allocation2 + $0x68] sm:$0xff] 0.0
    %36 = vst [vmem:[#allocation2 + $0x70] sm:$0xff] 0.0
    %37 = vst [vmem:[#allocation2 + $0x78] sm:$0xff] 0.0
  $region21: #{graphsage_forward.5} parent=0 // pred_fallthru
    _
  %s38 = smul.u32 0, 128
  %s39 = sshra.s32 %s38, 3
  %s40 = sand.u32 %s38, 7
  %s41 = smul.addr %s39, 4
  %s42 = scalar_lea.vmem %s2, %s41
  %v43 = vld [vmem:[%s42] sm:$0xf]
  %v44 = vld [vmem:[%s42 + $0x4] sm:$0xf]
  %v45 = vld [vmem:[%s42 + $0x8] sm:$0xf]
  %v46 = vld [vmem:[%s42 + $0xc] sm:$0xf]
  %v47 = vld [vmem:[%s42 + $0x10] sm:$0xf]
  %v48 = vld [vmem:[%s42 + $0x14] sm:$0xf]
  %v49 = vld [vmem:[%s42 + $0x18] sm:$0xf]
  %v50 = vld [vmem:[%s42 + $0x1c] sm:$0xf]
  %v51 = vld [vmem:[%s42 + $0x20] sm:$0xf]
  %v52 = vld [vmem:[%s42 + $0x24] sm:$0xf]
  %v53 = vld [vmem:[%s42 + $0x28] sm:$0xf]
  %v54 = vld [vmem:[%s42 + $0x2c] sm:$0xf]
  %v55 = vld [vmem:[%s42 + $0x30] sm:$0xf]
  %v56 = vld [vmem:[%s42 + $0x34] sm:$0xf]
  %v57 = vld [vmem:[%s42 + $0x38] sm:$0xf]
  %v58 = vld [vmem:[%s42 + $0x3c] sm:$0xf]
  %v59 = vld [vmem:[#allocation2] sm:$0xff]
  %v60 = vld [vmem:[#allocation2 + $0x8] sm:$0xff]
  %v61 = vld [vmem:[#allocation2 + $0x10] sm:$0xff]
  %v62 = vld [vmem:[#allocation2 + $0x18] sm:$0xff]
  %v63 = vld [vmem:[#allocation2 + $0x20] sm:$0xff]
  %v64 = vld [vmem:[#allocation2 + $0x28] sm:$0xff]
  %v65 = vld [vmem:[#allocation2 + $0x30] sm:$0xff]
  %v66 = vld [vmem:[#allocation2 + $0x38] sm:$0xff]
  %v67 = vld [vmem:[#allocation2 + $0x40] sm:$0xff]
  %v68 = vld [vmem:[#allocation2 + $0x48] sm:$0xff]
  %v69 = vld [vmem:[#allocation2 + $0x50] sm:$0xff]
  %v70 = vld [vmem:[#allocation2 + $0x58] sm:$0xff]
  %v71 = vld [vmem:[#allocation2 + $0x60] sm:$0xff]
  %v72 = vld [vmem:[#allocation2 + $0x68] sm:$0xff]
  %v73 = vld [vmem:[#allocation2 + $0x70] sm:$0xff]
  %v74 = vld [vmem:[#allocation2 + $0x78] sm:$0xff]
  %v75 = vld [vmem:[%s1] sm:$0xf]
  %v76 = vld [vmem:[%s1 + $0x4] sm:$0xf]
  %v77 = vld [vmem:[%s1 + $0x8] sm:$0xf]
  %v78 = vld [vmem:[%s1 + $0xc] sm:$0xf]
  %v79 = vld [vmem:[%s1 + $0x10] sm:$0xf]
  %v80 = vld [vmem:[%s1 + $0x14] sm:$0xf]
  %v81 = vld [vmem:[%s1 + $0x18] sm:$0xf]
  %v82 = vld [vmem:[%s1 + $0x1c] sm:$0xf]
  %v83 = vld [vmem:[%s1 + $0x20] sm:$0xf]
  %v84 = vld [vmem:[%s1 + $0x24] sm:$0xf]
  %v85 = vld [vmem:[%s1 + $0x28] sm:$0xf]
  %v86 = vld [vmem:[%s1 + $0x2c] sm:$0xf]
  %v87 = vld [vmem:[%s1 + $0x30] sm:$0xf]
  %v88 = vld [vmem:[%s1 + $0x34] sm:$0xf]
  %v89 = vld [vmem:[%s1 + $0x38] sm:$0xf]
  %v90 = vld [vmem:[%s1 + $0x3c] sm:$0xf]
  %v107 = vunpack.c.l.b16 %v75
  %v108 = vunpack.c.l.b16 %v76
  %v109 = vunpack.c.l.b16 %v77
  %v110 = vunpack.c.l.b16 %v78
  %v111 = vunpack.c.l.b16 %v79
  %v112 = vunpack.c.l.b16 %v80
  %v113 = vunpack.c.l.b16 %v81
  %v114 = vunpack.c.l.b16 %v82
  %v115 = vunpack.c.l.b16 %v83
  %v116 = vunpack.c.l.b16 %v84
  %v117 = vunpack.c.l.b16 %v85
  %v118 = vunpack.c.l.b16 %v86
  %v119 = vunpack.c.l.b16 %v87
  %v120 = vunpack.c.l.b16 %v88
  %v121 = vunpack.c.l.b16 %v89
  %v122 = vunpack.c.l.b16 %v90
  %v123 = vpack.c.b16 %v108, %v107
  %v124 = vpack.c.b16 %v110, %v109
  %v125 = vpack.c.b16 %v112, %v111
  %v126 = vpack.c.b16 %v114, %v113
  %v127 = vpack.c.b16 %v116, %v115
  %v128 = vpack.c.b16 %v118, %v117
  %v129 = vpack.c.b16 %v120, %v119
  %v130 = vpack.c.b16 %v122, %v121
  %v155 = vunpack.c.l.b16 %v43
  %v156 = vunpack.c.l.b16 %v44
  %v157 = vunpack.c.l.b16 %v45
  %v158 = vunpack.c.l.b16 %v46
  %v159 = vunpack.c.l.b16 %v47
  %v160 = vunpack.c.l.b16 %v48
  %v161 = vunpack.c.l.b16 %v49
  %v162 = vunpack.c.l.b16 %v50
  %v163 = vunpack.c.l.b16 %v51
  %v164 = vunpack.c.l.b16 %v52
  %v165 = vunpack.c.l.b16 %v53
  %v166 = vunpack.c.l.b16 %v54
  %v167 = vunpack.c.l.b16 %v55
  %v168 = vunpack.c.l.b16 %v56
  %v169 = vunpack.c.l.b16 %v57
  %v170 = vunpack.c.l.b16 %v58
  %v171 = vpack.c.b16 %v156, %v155
  %v172 = vpack.c.b16 %v158, %v157
  %v173 = vpack.c.b16 %v160, %v159
  %v174 = vpack.c.b16 %v162, %v161
  %v175 = vpack.c.b16 %v164, %v163
  %v176 = vpack.c.b16 %v166, %v165
  %v177 = vpack.c.b16 %v168, %v167
  %v178 = vpack.c.b16 %v170, %v169
  %187 = vmatprep.subr.bf16.mxu0 0
  %188 = vmatpush1.bf16.msra.mxu0 %v178
  %189 = vmatprep.subr.bf16.mxu0 0
  %190 = vmatpush1.bf16.msra.mxu0 %v177
  %191 = vmatprep.subr.bf16.mxu0 0
  %192 = vmatpush1.bf16.msra.mxu0 %v176
  %193 = vmatprep.subr.bf16.mxu0 0
  %194 = vmatpush1.bf16.msra.mxu0 %v175
  %195 = vmatprep.subr.bf16.mxu0 0
  %196 = vmatpush1.bf16.msra.mxu0 %v174
  %197 = vmatprep.subr.bf16.mxu0 0
  %198 = vmatpush1.bf16.msra.mxu0 %v173
  %199 = vmatprep.subr.bf16.mxu0 0
  %200 = vmatpush1.bf16.msra.mxu0 %v172
  %201 = vmatprep.subr.bf16.mxu0 0
  %202 = vmatpush1.bf16.msra.mxu0 %v171
  %203 = vmatprep.subr.bf16.mxu0 0
  %204 = vmatpush2.bf16.msra.mxu0 0
  %205 = vmatprep.subr.bf16.mxu0 0
  %206 = vmatpush2.bf16.msra.mxu0 0
  %207 = vmatprep.subr.bf16.mxu0 0
  %208 = vmatpush2.bf16.msra.mxu0 0
  %209 = vmatprep.subr.bf16.mxu0 0
  %210 = vmatpush2.bf16.msra.mxu0 0
  %211 = vmatprep.subr.bf16.mxu0 0
  %212 = vmatpush2.bf16.msra.mxu0 0
  %213 = vmatprep.subr.bf16.mxu0 0
  %214 = vmatpush2.bf16.msra.mxu0 0
  %215 = vmatprep.subr.bf16.mxu0 0
  %216 = vmatpush2.bf16.msra.mxu0 0
  %217 = vmatprep.subr.bf16.mxu0 0
  %218 = vmatpush2.bf16.msra.mxu0 0
  %219 = vmatprep.mubr.bf16.mxu0 0
  %220 = vmatmul.mubr.bf16.gmra.mxu0 %v123
  %v221 = vpop.f32.mrf.mxu0
  %v222 = vadd.f32 0.0, %v221
  %v223 = vpop.f32.mrf.mxu0
  %v224 = vpop.f32.mrf.mxu0
  %v225 = vadd.f32 0.0, %v224
  %v226 = vpop.f32.mrf.mxu0
  %227 = vmatprep.mubr.bf16.mxu0 0
  %228 = vmatmul.mubr.bf16.gmra.mxu0 %v124
  %v229 = vpop.f32.mrf.mxu0
  %v230 = vadd.f32 0.0, %v229
  %v231 = vpop.f32.mrf.mxu0
  %v232 = vpop.f32.mrf.mxu0
  %v233 = vadd.f32 0.0, %v232
  %v234 = vpop.f32.mrf.mxu0
  %235 = vmatprep.mubr.bf16.mxu0 0
  %236 = vmatmul.mubr.bf16.gmra.mxu0 %v125
  %v237 = vpop.f32.mrf.mxu0
  %v238 = vadd.f32 0.0, %v237
  %v239 = vpop.f32.mrf.mxu0
  %v240 = vpop.f32.mrf.mxu0
  %v241 = vadd.f32 0.0, %v240
  %v242 = vpop.f32.mrf.mxu0
  %243 = vmatprep.mubr.bf16.mxu0 0
  %244 = vmatmul.mubr.bf16.gmra.mxu0 %v126
  %v245 = vpop.f32.mrf.mxu0
  %v246 = vadd.f32 0.0, %v245
  %v247 = vpop.f32.mrf.mxu0
  %v248 = vpop.f32.mrf.mxu0
  %v249 = vadd.f32 0.0, %v248
  %v250 = vpop.f32.mrf.mxu0
  %251 = vmatprep.mubr.bf16.mxu0 0
  %252 = vmatmul.mubr.bf16.gmra.mxu0 %v127
  %v253 = vpop.f32.mrf.mxu0
  %v254 = vadd.f32 0.0, %v253
  %v255 = vpop.f32.mrf.mxu0
  %v256 = vpop.f32.mrf.mxu0
  %v257 = vadd.f32 0.0, %v256
  %v258 = vpop.f32.mrf.mxu0
  %259 = vmatprep.mubr.bf16.mxu0 0
  %260 = vmatmul.mubr.bf16.gmra.mxu0 %v128
  %v261 = vpop.f32.mrf.mxu0
  %v262 = vadd.f32 0.0, %v261
  %v263 = vpop.f32.mrf.mxu0
  %v264 = vpop.f32.mrf.mxu0
  %v265 = vadd.f32 0.0, %v264
  %v266 = vpop.f32.mrf.mxu0
  %267 = vmatprep.mubr.bf16.mxu0 0
  %268 = vmatmul.mubr.bf16.gmra.mxu0 %v129
  %v269 = vpop.f32.mrf.mxu0
  %v270 = vadd.f32 0.0, %v269
  %v271 = vpop.f32.mrf.mxu0
  %v272 = vpop.f32.mrf.mxu0
  %v273 = vadd.f32 0.0, %v272
  %v274 = vpop.f32.mrf.mxu0
  %275 = vmatprep.mubr.bf16.mxu0 0
  %276 = vmatmul.mubr.bf16.gmra.mxu0 %v130
  %v277 = vpop.f32.mrf.mxu0
  %v278 = vadd.f32 0.0, %v277
  %v279 = vpop.f32.mrf.mxu0
  %v280 = vpop.f32.mrf.mxu0
  %v281 = vadd.f32 0.0, %v280
  %v282 = vpop.f32.mrf.mxu0
  %283 = vdwg.mxu0
  %v284 = vadd.f32 %v59, %v222
  %v285 = vadd.f32 %v60, %v225
  %v286 = vadd.f32 %v61, %v230
  %v287 = vadd.f32 %v62, %v233
  %v288 = vadd.f32 %v63, %v238
  %v289 = vadd.f32 %v64, %v241
  %v290 = vadd.f32 %v65, %v246
  %v291 = vadd.f32 %v66, %v249
  %v292 = vadd.f32 %v67, %v254
  %v293 = vadd.f32 %v68, %v257
  %v294 = vadd.f32 %v69, %v262
  %v295 = vadd.f32 %v70, %v265
  %v296 = vadd.f32 %v71, %v270
  %v297 = vadd.f32 %v72, %v273
  %v298 = vadd.f32 %v73, %v278
  %v299 = vadd.f32 %v74, %v281
  %300 = vst [vmem:[#allocation2] sm:$0xff] %v284
  %301 = vst [vmem:[#allocation2 + $0x8] sm:$0xff] %v285
  %302 = vst [vmem:[#allocation2 + $0x10] sm:$0xff] %v286
  %303 = vst [vmem:[#allocation2 + $0x18] sm:$0xff] %v287
  %304 = vst [vmem:[#allocation2 + $0x20] sm:$0xff] %v288
  %305 = vst [vmem:[#allocation2 + $0x28] sm:$0xff] %v289
  %306 = vst [vmem:[#allocation2 + $0x30] sm:$0xff] %v290
  %307 = vst [vmem:[#allocation2 + $0x38] sm:$0xff] %v291
  %308 = vst [vmem:[#allocation2 + $0x40] sm:$0xff] %v292
  %309 = vst [vmem:[#allocation2 + $0x48] sm:$0xff] %v293
  %310 = vst [vmem:[#allocation2 + $0x50] sm:$0xff] %v294
  %311 = vst [vmem:[#allocation2 + $0x58] sm:$0xff] %v295
  %312 = vst [vmem:[#allocation2 + $0x60] sm:$0xff] %v296
  %313 = vst [vmem:[#allocation2 + $0x68] sm:$0xff] %v297
  %314 = vst [vmem:[#allocation2 + $0x70] sm:$0xff] %v298
  %315 = vst [vmem:[#allocation2 + $0x78] sm:$0xff] %v299
  // Predicated region
  $region22: #{graphsage_forward.5} parent=0 // pred_check
    %p316 = pneg %p18
  $region23: #{graphsage_forward.5} parent=0 // pred_check_branch
    %318 = sbr.rel (%p316) target = $region25
  $region24: #{graphsage_forward.5} parent=0 // pred_region
    %v319 = vld [vmem:[#allocation2] sm:$0xff]
    %v320 = vld [vmem:[#allocation2 + $0x8] sm:$0xff]
    %v321 = vld [vmem:[#allocation2 + $0x10] sm:$0xff]
    %v322 = vld [vmem:[#allocation2 + $0x18] sm:$0xff]
    %v323 = vld [vmem:[#allocation2 + $0x20] sm:$0xff]
    %v324 = vld [vmem:[#allocation2 + $0x28] sm:$0xff]
    %v325 = vld [vmem:[#allocation2 + $0x30] sm:$0xff]
    %v326 = vld [vmem:[#allocation2 + $0x38] sm:$0xff]
    %v327 = vld [vmem:[#allocation2 + $0x40] sm:$0xff]
    %v328 = vld [vmem:[#allocation2 + $0x48] sm:$0xff]
    %v329 = vld [vmem:[#allocation2 + $0x50] sm:$0xff]
    %v330 = vld [vmem:[#allocation2 + $0x58] sm:$0xff]
    %v331 = vld [vmem:[#allocation2 + $0x60] sm:$0xff]
    %v332 = vld [vmem:[#allocation2 + $0x68] sm:$0xff]
    %v333 = vld [vmem:[#allocation2 + $0x70] sm:$0xff]
    %v334 = vld [vmem:[#allocation2 + $0x78] sm:$0xff]
    %v335 = vpack.c.bf16 %v320, %v319
    %v336 = vpack.c.bf16 %v322, %v321
    %v337 = vpack.c.bf16 %v324, %v323
    %v338 = vpack.c.bf16 %v326, %v325
    %v339 = vpack.c.bf16 %v328, %v327
    %v340 = vpack.c.bf16 %v330, %v329
    %v341 = vpack.c.bf16 %v332, %v331
    %v342 = vpack.c.bf16 %v334, %v333
    %v343 = vld [vmem:[%s0] sm:$0xff]
    %v344 = vld [vmem:[%s0 + $0x8] sm:$0xff]
    %v345 = vld [vmem:[%s0 + $0x10] sm:$0xff]
    %v346 = vld [vmem:[%s0 + $0x18] sm:$0xff]
    %v347 = vld [vmem:[%s0 + $0x20] sm:$0xff]
    %v348 = vld [vmem:[%s0 + $0x28] sm:$0xff]
    %v349 = vld [vmem:[%s0 + $0x30] sm:$0xff]
    %v350 = vld [vmem:[%s0 + $0x38] sm:$0xff]
    %v351 = vld [vmem:[%s0 + $0x40] sm:$0xff]
    %v352 = vld [vmem:[%s0 + $0x48] sm:$0xff]
    %v353 = vld [vmem:[%s0 + $0x50] sm:$0xff]
    %v354 = vld [vmem:[%s0 + $0x58] sm:$0xff]
    %v355 = vld [vmem:[%s0 + $0x60] sm:$0xff]
    %v356 = vld [vmem:[%s0 + $0x68] sm:$0xff]
    %v357 = vld [vmem:[%s0 + $0x70] sm:$0xff]
    %v358 = vld [vmem:[%s0 + $0x78] sm:$0xff]
    %v359 = vld [vmem:[%s0 + $0x80] sm:$0xff]
    %v360 = vld [vmem:[%s0 + $0x88] sm:$0xff]
    %v361 = vld [vmem:[%s0 + $0x90] sm:$0xff]
    %v362 = vld [vmem:[%s0 + $0x98] sm:$0xff]
    %v363 = vld [vmem:[%s0 + $0xa0] sm:$0xff]
    %v364 = vld [vmem:[%s0 + $0xa8] sm:$0xff]
    %v365 = vld [vmem:[%s0 + $0xb0] sm:$0xff]
    %v366 = vld [vmem:[%s0 + $0xb8] sm:$0xff]
    %v367 = vld [vmem:[%s0 + $0xc0] sm:$0xff]
    %v368 = vld [vmem:[%s0 + $0xc8] sm:$0xff]
    %v369 = vld [vmem:[%s0 + $0xd0] sm:$0xff]
    %v370 = vld [vmem:[%s0 + $0xd8] sm:$0xff]
    %v371 = vld [vmem:[%s0 + $0xe0] sm:$0xff]
    %v372 = vld [vmem:[%s0 + $0xe8] sm:$0xff]
    %v373 = vld [vmem:[%s0 + $0xf0] sm:$0xff]
    %v374 = vld [vmem:[%s0 + $0xf8] sm:$0xff]
    %v375 = vld [vmem:[%s3] sm:$0xff]
    %v376 = vld [vmem:[%s3 + $0x8] sm:$0xff]
    %v377 = vld [vmem:[%s3 + $0x10] sm:$0xff]
    %v378 = vld [vmem:[%s3 + $0x18] sm:$0xff]
    %v379 = vld [vmem:[%s3 + $0x20] sm:$0xff]
    %v380 = vld [vmem:[%s3 + $0x28] sm:$0xff]
    %v381 = vld [vmem:[%s3 + $0x30] sm:$0xff]
    %v382 = vld [vmem:[%s3 + $0x38] sm:$0xff]
    %v383 = vld [vmem:[%s3 + $0x40] sm:$0xff]
    %v384 = vld [vmem:[%s3 + $0x48] sm:$0xff]
    %v385 = vld [vmem:[%s3 + $0x50] sm:$0xff]
    %v386 = vld [vmem:[%s3 + $0x58] sm:$0xff]
    %v387 = vld [vmem:[%s3 + $0x60] sm:$0xff]
    %v388 = vld [vmem:[%s3 + $0x68] sm:$0xff]
    %v389 = vld [vmem:[%s3 + $0x70] sm:$0xff]
    %v390 = vld [vmem:[%s3 + $0x78] sm:$0xff]
    %v407 = vunpack.c.l.b16 %v375
    %v408 = vunpack.c.h.b16 %v375
    %v409 = vunpack.c.l.b16 %v376
    %v410 = vunpack.c.h.b16 %v376
    %v411 = vunpack.c.l.b16 %v377
    %v412 = vunpack.c.h.b16 %v377
    %v413 = vunpack.c.l.b16 %v378
    %v414 = vunpack.c.h.b16 %v378
    %v415 = vunpack.c.l.b16 %v379
    %v416 = vunpack.c.h.b16 %v379
    %v417 = vunpack.c.l.b16 %v380
    %v418 = vunpack.c.h.b16 %v380
    %v419 = vunpack.c.l.b16 %v381
    %v420 = vunpack.c.h.b16 %v381
    %v421 = vunpack.c.l.b16 %v382
    %v422 = vunpack.c.h.b16 %v382
    %v423 = vunpack.c.l.b16 %v383
    %v424 = vunpack.c.h.b16 %v383
    %v425 = vunpack.c.l.b16 %v384
    %v426 = vunpack.c.h.b16 %v384
    %v427 = vunpack.c.l.b16 %v385
    %v428 = vunpack.c.h.b16 %v385
    %v429 = vunpack.c.l.b16 %v386
    %v430 = vunpack.c.h.b16 %v386
    %v431 = vunpack.c.l.b16 %v387
    %v432 = vunpack.c.h.b16 %v387
    %v433 = vunpack.c.l.b16 %v388
    %v434 = vunpack.c.h.b16 %v388
    %v435 = vunpack.c.l.b16 %v389
    %v436 = vunpack.c.h.b16 %v389
    %v437 = vunpack.c.l.b16 %v390
    %v438 = vunpack.c.h.b16 %v390
    %v439 = vpack.c.b16 %v409, %v407
    %v440 = vpack.c.b16 %v410, %v408
    %v441 = vpack.c.b16 %v413, %v411
    %v442 = vpack.c.b16 %v414, %v412
    %v443 = vpack.c.b16 %v417, %v415
    %v444 = vpack.c.b16 %v418, %v416
    %v445 = vpack.c.b16 %v421, %v419
    %v446 = vpack.c.b16 %v422, %v420
    %v447 = vpack.c.b16 %v425, %v423
    %v448 = vpack.c.b16 %v426, %v424
    %v449 = vpack.c.b16 %v429, %v427
    %v450 = vpack.c.b16 %v430, %v428
    %v451 = vpack.c.b16 %v433, %v431
    %v452 = vpack.c.b16 %v434, %v432
    %v453 = vpack.c.b16 %v437, %v435
    %v454 = vpack.c.b16 %v438, %v436
    %471 = vmatprep.subr.bf16.mxu0 %v454
    %472 = vmatpush1.bf16.msra.mxu0 %v453
    %473 = vmatprep.subr.bf16.mxu0 %v452
    %474 = vmatpush1.bf16.msra.mxu0 %v451
    %475 = vmatprep.subr.bf16.mxu0 %v450
    %476 = vmatpush1.bf16.msra.mxu0 %v449
    %477 = vmatprep.subr.bf16.mxu0 %v448
    %478 = vmatpush1.bf16.msra.mxu0 %v447
    %479 = vmatprep.subr.bf16.mxu0 %v446
    %480 = vmatpush1.bf16.msra.mxu0 %v445
    %481 = vmatprep.subr.bf16.mxu0 %v444
    %482 = vmatpush1.bf16.msra.mxu0 %v443
    %483 = vmatprep.subr.bf16.mxu0 %v442
    %484 = vmatpush1.bf16.msra.mxu0 %v441
    %485 = vmatprep.subr.bf16.mxu0 %v440
    %486 = vmatpush1.bf16.msra.mxu0 %v439
    %487 = vmatprep.subr.bf16.mxu0 0
    %488 = vmatpush2.bf16.msra.mxu0 0
    %489 = vmatprep.subr.bf16.mxu0 0
    %490 = vmatpush2.bf16.msra.mxu0 0
    %491 = vmatprep.subr.bf16.mxu0 0
    %492 = vmatpush2.bf16.msra.mxu0 0
    %493 = vmatprep.subr.bf16.mxu0 0
    %494 = vmatpush2.bf16.msra.mxu0 0
    %495 = vmatprep.subr.bf16.mxu0 0
    %496 = vmatpush2.bf16.msra.mxu0 0
    %497 = vmatprep.subr.bf16.mxu0 0
    %498 = vmatpush2.bf16.msra.mxu0 0
    %499 = vmatprep.subr.bf16.mxu0 0
    %500 = vmatpush2.bf16.msra.mxu0 0
    %501 = vmatprep.subr.bf16.mxu0 0
    %502 = vmatpush2.bf16.msra.mxu0 0
    %503 = vmatprep.mubr.bf16.mxu0 0
    %504 = vmatmul.mubr.bf16.gmra.mxu0 %v335
    %v505 = vpop.f32.mrf.mxu0
    %v506 = vadd.f32 0.0, %v505
    %v507 = vpop.f32.mrf.mxu0
    %v508 = vadd.f32 0.0, %v507
    %v509 = vpop.f32.mrf.mxu0
    %v510 = vadd.f32 0.0, %v509
    %v511 = vpop.f32.mrf.mxu0
    %v512 = vadd.f32 0.0, %v511
    %513 = vmatprep.mubr.bf16.mxu0 0
    %514 = vmatmul.mubr.bf16.gmra.mxu0 %v336
    %v515 = vpop.f32.mrf.mxu0
    %v516 = vadd.f32 0.0, %v515
    %v517 = vpop.f32.mrf.mxu0
    %v518 = vadd.f32 0.0, %v517
    %v519 = vpop.f32.mrf.mxu0
    %v520 = vadd.f32 0.0, %v519
    %v521 = vpop.f32.mrf.mxu0
    %v522 = vadd.f32 0.0, %v521
    %523 = vmatprep.mubr.bf16.mxu0 0
    %524 = vmatmul.mubr.bf16.gmra.mxu0 %v337
    %v525 = vpop.f32.mrf.mxu0
    %v526 = vadd.f32 0.0, %v525
    %v527 = vpop.f32.mrf.mxu0
    %v528 = vadd.f32 0.0, %v527
    %v529 = vpop.f32.mrf.mxu0
    %v530 = vadd.f32 0.0, %v529
    %v531 = vpop.f32.mrf.mxu0
    %v532 = vadd.f32 0.0, %v531
    %533 = vmatprep.mubr.bf16.mxu0 0
    %534 = vmatmul.mubr.bf16.gmra.mxu0 %v338
    %v535 = vpop.f32.mrf.mxu0
    %v536 = vadd.f32 0.0, %v535
    %v537 = vpop.f32.mrf.mxu0
    %v538 = vadd.f32 0.0, %v537
    %v539 = vpop.f32.mrf.mxu0
    %v540 = vadd.f32 0.0, %v539
    %v541 = vpop.f32.mrf.mxu0
    %v542 = vadd.f32 0.0, %v541
    %543 = vmatprep.mubr.bf16.mxu0 0
    %544 = vmatmul.mubr.bf16.gmra.mxu0 %v339
    %v545 = vpop.f32.mrf.mxu0
    %v546 = vadd.f32 0.0, %v545
    %v547 = vpop.f32.mrf.mxu0
    %v548 = vadd.f32 0.0, %v547
    %v549 = vpop.f32.mrf.mxu0
    %v550 = vadd.f32 0.0, %v549
    %v551 = vpop.f32.mrf.mxu0
    %v552 = vadd.f32 0.0, %v551
    %553 = vmatprep.mubr.bf16.mxu0 0
    %554 = vmatmul.mubr.bf16.gmra.mxu0 %v340
    %v555 = vpop.f32.mrf.mxu0
    %v556 = vadd.f32 0.0, %v555
    %v557 = vpop.f32.mrf.mxu0
    %v558 = vadd.f32 0.0, %v557
    %v559 = vpop.f32.mrf.mxu0
    %v560 = vadd.f32 0.0, %v559
    %v561 = vpop.f32.mrf.mxu0
    %v562 = vadd.f32 0.0, %v561
    %563 = vmatprep.mubr.bf16.mxu0 0
    %564 = vmatmul.mubr.bf16.gmra.mxu0 %v341
    %v565 = vpop.f32.mrf.mxu0
    %v566 = vadd.f32 0.0, %v565
    %v567 = vpop.f32.mrf.mxu0
    %v568 = vadd.f32 0.0, %v567
    %v569 = vpop.f32.mrf.mxu0
    %v570 = vadd.f32 0.0, %v569
    %v571 = vpop.f32.mrf.mxu0
    %v572 = vadd.f32 0.0, %v571
    %573 = vmatprep.mubr.bf16.mxu0 0
    %574 = vmatmul.mubr.bf16.gmra.mxu0 %v342
    %v575 = vpop.f32.mrf.mxu0
    %v576 = vadd.f32 0.0, %v575
    %v577 = vpop.f32.mrf.mxu0
    %v578 = vadd.f32 0.0, %v577
    %v579 = vpop.f32.mrf.mxu0
    %v580 = vadd.f32 0.0, %v579
    %v581 = vpop.f32.mrf.mxu0
    %v582 = vadd.f32 0.0, %v581
    %583 = vdwg.mxu0
    %v584 = vadd.f32 %v343, %v506
    %v585 = vadd.f32 %v344, %v508
    %v586 = vadd.f32 %v345, %v510
    %v587 = vadd.f32 %v346, %v512
    %v588 = vadd.f32 %v347, %v516
    %v589 = vadd.f32 %v348, %v518
    %v590 = vadd.f32 %v349, %v520
    %v591 = vadd.f32 %v350, %v522
    %v592 = vadd.f32 %v351, %v526
    %v593 = vadd.f32 %v352, %v528
    %v594 = vadd.f32 %v353, %v530
    %v595 = vadd.f32 %v354, %v532
    %v596 = vadd.f32 %v355, %v536
    %v597 = vadd.f32 %v356, %v538
    %v598 = vadd.f32 %v357, %v540
    %v599 = vadd.f32 %v358, %v542
    %v600 = vadd.f32 %v359, %v546
    %v601 = vadd.f32 %v360, %v548
    %v602 = vadd.f32 %v361, %v550
    %v603 = vadd.f32 %v362, %v552
    %v604 = vadd.f32 %v363, %v556
    %v605 = vadd.f32 %v364, %v558
    %v606 = vadd.f32 %v365, %v560
    %v607 = vadd.f32 %v366, %v562
    %v608 = vadd.f32 %v367, %v566
    %v609 = vadd.f32 %v368, %v568
    %v610 = vadd.f32 %v369, %v570
    %v611 = vadd.f32 %v370, %v572
    %v612 = vadd.f32 %v371, %v576
    %v613 = vadd.f32 %v372, %v578
    %v614 = vadd.f32 %v373, %v580
    %v615 = vadd.f32 %v374, %v582
    %v616 = vmax.f32 %v584, 0.0
    %v617 = vmax.f32 %v585, 0.0
    %v618 = vmax.f32 %v586, 0.0
    %v619 = vmax.f32 %v587, 0.0
    %v620 = vmax.f32 %v588, 0.0
    %v621 = vmax.f32 %v589, 0.0
    %v622 = vmax.f32 %v590, 0.0
    %v623 = vmax.f32 %v591, 0.0
    %v624 = vmax.f32 %v592, 0.0
    %v625 = vmax.f32 %v593, 0.0
    %v626 = vmax.f32 %v594, 0.0
    %v627 = vmax.f32 %v595, 0.0
    %v628 = vmax.f32 %v596, 0.0
    %v629 = vmax.f32 %v597, 0.0
    %v630 = vmax.f32 %v598, 0.0
    %v631 = vmax.f32 %v599, 0.0
    %v632 = vmax.f32 %v600, 0.0
    %v633 = vmax.f32 %v601, 0.0
    %v634 = vmax.f32 %v602, 0.0
    %v635 = vmax.f32 %v603, 0.0
    %v636 = vmax.f32 %v604, 0.0
    %v637 = vmax.f32 %v605, 0.0
    %v638 = vmax.f32 %v606, 0.0
    %v639 = vmax.f32 %v607, 0.0
    %v640 = vmax.f32 %v608, 0.0
    %v641 = vmax.f32 %v609, 0.0
    %v642 = vmax.f32 %v610, 0.0
    %v643 = vmax.f32 %v611, 0.0
    %v644 = vmax.f32 %v612, 0.0
    %v645 = vmax.f32 %v613, 0.0
    %v646 = vmax.f32 %v614, 0.0
    %v647 = vmax.f32 %v615, 0.0
    %v648 = vpack.c.bf16 %v618, %v616
    %v649 = vpack.c.bf16 %v619, %v617
    %v650 = vpack.c.bf16 %v622, %v620
    %v651 = vpack.c.bf16 %v623, %v621
    %v652 = vpack.c.bf16 %v626, %v624
    %v653 = vpack.c.bf16 %v627, %v625
    %v654 = vpack.c.bf16 %v630, %v628
    %v655 = vpack.c.bf16 %v631, %v629
    %v656 = vpack.c.bf16 %v634, %v632
    %v657 = vpack.c.bf16 %v635, %v633
    %v658 = vpack.c.bf16 %v638, %v636
    %v659 = vpack.c.bf16 %v639, %v637
    %v660 = vpack.c.bf16 %v642, %v640
    %v661 = vpack.c.bf16 %v643, %v641
    %v662 = vpack.c.bf16 %v646, %v644
    %v663 = vpack.c.bf16 %v647, %v645
    %v680 = vunpack.c.l.b16 %v648
    %v681 = vunpack.c.l.b16 %v649
    %v682 = vunpack.c.h.b16 %v648
    %v683 = vunpack.c.h.b16 %v649
    %v684 = vunpack.c.l.b16 %v650
    %v685 = vunpack.c.l.b16 %v651
    %v686 = vunpack.c.h.b16 %v650
    %v687 = vunpack.c.h.b16 %v651
    %v688 = vunpack.c.l.b16 %v652
    %v689 = vunpack.c.l.b16 %v653
    %v690 = vunpack.c.h.b16 %v652
    %v691 = vunpack.c.h.b16 %v653
    %v692 = vunpack.c.l.b16 %v654
    %v693 = vunpack.c.l.b16 %v655
    %v694 = vunpack.c.h.b16 %v654
    %v695 = vunpack.c.h.b16 %v655
    %v696 = vunpack.c.l.b16 %v656
    %v697 = vunpack.c.l.b16 %v657
    %v698 = vunpack.c.h.b16 %v656
    %v699 = vunpack.c.h.b16 %v657
    %v700 = vunpack.c.l.b16 %v658
    %v701 = vunpack.c.l.b16 %v659
    %v702 = vunpack.c.h.b16 %v658
    %v703 = vunpack.c.h.b16 %v659
    %v704 = vunpack.c.l.b16 %v660
    %v705 = vunpack.c.l.b16 %v661
    %v706 = vunpack.c.h.b16 %v660
    %v707 = vunpack.c.h.b16 %v661
    %v708 = vunpack.c.l.b16 %v662
    %v709 = vunpack.c.l.b16 %v663
    %v710 = vunpack.c.h.b16 %v662
    %v711 = vunpack.c.h.b16 %v663
    %v712 = vpack.c.b16 %v681, %v680
    %v713 = vpack.c.b16 %v683, %v682
    %v714 = vpack.c.b16 %v685, %v684
    %v715 = vpack.c.b16 %v687, %v686
    %v716 = vpack.c.b16 %v689, %v688
    %v717 = vpack.c.b16 %v691, %v690
    %v718 = vpack.c.b16 %v693, %v692
    %v719 = vpack.c.b16 %v695, %v694
    %v720 = vpack.c.b16 %v697, %v696
    %v721 = vpack.c.b16 %v699, %v698
    %v722 = vpack.c.b16 %v701, %v700
    %v723 = vpack.c.b16 %v703, %v702
    %v724 = vpack.c.b16 %v705, %v704
    %v725 = vpack.c.b16 %v707, %v706
    %v726 = vpack.c.b16 %v709, %v708
    %v727 = vpack.c.b16 %v711, %v710
    %744 = vst [vmem:[%s4] sm:$0xff] %v712
    %745 = vst [vmem:[%s4 + $0x8] sm:$0xff] %v713
    %746 = vst [vmem:[%s4 + $0x10] sm:$0xff] %v714
    %747 = vst [vmem:[%s4 + $0x18] sm:$0xff] %v715
    %748 = vst [vmem:[%s4 + $0x20] sm:$0xff] %v716
    %749 = vst [vmem:[%s4 + $0x28] sm:$0xff] %v717
    %750 = vst [vmem:[%s4 + $0x30] sm:$0xff] %v718
    %751 = vst [vmem:[%s4 + $0x38] sm:$0xff] %v719
    %752 = vst [vmem:[%s4 + $0x40] sm:$0xff] %v720
    %753 = vst [vmem:[%s4 + $0x48] sm:$0xff] %v721
    %754 = vst [vmem:[%s4 + $0x50] sm:$0xff] %v722
    %755 = vst [vmem:[%s4 + $0x58] sm:$0xff] %v723
    %756 = vst [vmem:[%s4 + $0x60] sm:$0xff] %v724
    %757 = vst [vmem:[%s4 + $0x68] sm:$0xff] %v725
    %758 = vst [vmem:[%s4 + $0x70] sm:$0xff] %v726
    %759 = vst [vmem:[%s4 + $0x78] sm:$0xff] %v727
  $region25: #{graphsage_forward.5} parent=0 // pred_fallthru
    _
  // Predicated region
  $region26: #{graphsage_forward.5} parent=0 // pred_check
    _
  $region27: #{graphsage_forward.5} parent=0 // pred_check_branch
    %761 = sbr.rel (0) target = $region29
  $region28: #{graphsage_forward.5} parent=0 // pred_region
    _
  $region29: #{graphsage_forward.5} parent=0 // pred_fallthru
    _
  // Predicated region
  $region30: #{graphsage_forward.5} parent=0 // pred_check
    _
  $region31: #{graphsage_forward.5} parent=0 // pred_check_branch
    %763 = sbr.rel (0) target = $region33
  $region32: #{graphsage_forward.5} parent=0 // pred_region
    _
  $region33: #{graphsage_forward.5} parent=0 // pred_fallthru
    _

</llo_original>
